<compile_context>
chip_gen: v5e
topology: v5e:2x2
jax: 0.10.0
libtpu: 0.0.40
codegen_flags: <defaults>
</compile_context>

<pallas_src>
import math
import functools

import jax
import jax.numpy as jnp
from jax.experimental import pallas as pl
from jax.experimental.pallas import tpu as pltpu


def _round_up(x, m):
    return (x + m - 1) // m * m


def _styled_conv_kernel(TH, W, K, Cin, TCout,
                        x_ref, w_ref, noise_ref, bias_ref, out_ref):
    f32 = jnp.float32
    THp = TH + K - 1                       # halo'd row window (odd K)

    r = pl.program_id(2)
    row_start = r * TH
    if TH % 8 == 0:
        row_start = pl.multiple_of(row_start, 8)

    acc = None
    for kw in range(K):
        # One sublane-shifted slab per kw (K copies per step, not K*K); the kh
        # offsets below are sublane-aligned views into it (free when W % 8 == 0).
        slab = x_ref[0, pl.ds(row_start, THp), kw:kw + W, :]      # (THp, W, Cin) bf16
        slab = slab.reshape(THp * W, Cin)
        for kh in range(K):
            lhs = slab[kh * W:kh * W + TH * W]                    # (TH*W, Cin)
            part = jnp.dot(lhs, w_ref[0, kh * K + kw],
                           preferred_element_type=f32)            # MXU, f32 accumulation
            acc = part if acc is None else acc + part

    out = acc.reshape(TH, W, TCout)

    # ---- NoiseInjection (noise already scaled by its weight in the wrapper) ----
    out = out + noise_ref[0][:, :, None]

    # ---- FusedLeakyReLU: leaky_relu(out + bias, 0.2) * sqrt(2) ----
    out = out + bias_ref[...].reshape(1, 1, TCout)
    out = jnp.where(out >= 0.0, out, 0.2 * out) * f32(math.sqrt(2.0))
    out_ref[0] = out.astype(out_ref.dtype)


def _choose_row_tile(H, W, Cin, tcout, K, budget=8 << 20):
    """Largest row tile (multiple of 8 dividing H, or H itself) whose per-step
    working set (shift slabs + accumulator + double-buffered output) fits."""
    lane = lambda c: max(c, 128)
    cands = sorted({d for d in range(1, H + 1)
                    if H % d == 0 and (d % 8 == 0 or d == H)}, reverse=True)
    for th in cands:
        thp = th + K - 1
        step = (K * thp * W * lane(Cin) * 2        # kw-shifted slabs (bf16)
                + th * W * lane(tcout) * 4         # f32 accumulator
                + 2 * th * W * lane(tcout) * 4     # double-buffered output tile
                + 2 * th * lane(W) * 4)            # noise tile
        if step <= budget:
            return th
    return cands[-1]


def _vmem_limit_bytes(Hp, Wp, Cin, K, TH, W, TCout):
    lane = lambda c: max(c, 128)
    THp = TH + K - 1
    x_res = 2 * Hp * Wp * lane(Cin) * 2                 # resident x slab (double-buffered)
    w_tile = 2 * K * K * max(Cin, 16) * lane(TCout) * 2
    out_tile = 2 * TH * W * lane(TCout) * 4
    noise_tile = 2 * TH * lane(W) * 4
    scratch = K * THp * W * lane(Cin) * 2 + 2 * TH * W * lane(TCout) * 4
    est = x_res + w_tile + out_tile + noise_tile + scratch
    return int(min(max(int(est * 1.25) + (4 << 20), 32 << 20), 64 << 20))


def styled_conv_forward(x_nchw, style, params, noise_nchw, *, out_dtype=jnp.float32):
    conv_w = params["conv_weight"]      # (Cout, Cin, K, K)  (torch (1,Cout,Cin,K,K) squeezed)
    mod_w = params["mod_weight"]        # (Cin, style_dim)
    mod_b = params["mod_bias"]          # (Cin,)
    noise_w = params["noise_weight"]    # () scalar
    act_b = params["act_bias"]          # (Cout,)

    B, Cin, H, W = x_nchw.shape
    Cout, _, K, _ = conv_w.shape
    SD = mod_w.shape[1]
    assert K % 2 == 1, "only odd kernel sizes (PyTorch 'same' conv) are supported"
    pad = K // 2
    Hp, Wp = H + 2 * pad, W + 2 * pad

    conv_scale = 1.0 / math.sqrt(Cin * K * K)
    mod_scale = 1.0 / math.sqrt(SD)     # lr_mul = 1

    CoutP = _round_up(Cout, 128)        # lane-dense output / filled MXU N dim
    TCout = 256 if CoutP % 256 == 0 else 128
    COT = CoutP // TCout
    TH = _choose_row_tile(H, W, Cin, TCout, K)
    assert H % TH == 0
    RT = H // TH

    f32 = jnp.float32

    # ---- modulation + demodulation + weight fold: tiny, once per call, plain JAX ----
    sm = style.astype(f32) @ (mod_scale * mod_w.astype(f32)).T + mod_b.astype(f32)   # (B, Cin)
    w_eff = conv_scale * conv_w.astype(f32)                                          # (Cout, Cin, K, K)
    w_mod = w_eff[None] * sm[:, None, :, None, None]                                 # (B, Cout, Cin, K, K)
    demod = jax.lax.rsqrt(jnp.sum(w_mod * w_mod, axis=(2, 3, 4)) + 1e-8)             # (B, Cout)
    w_fold = w_mod * demod[:, :, None, None, None]
    w_fold = jnp.transpose(w_fold, (0, 3, 4, 2, 1)).reshape(B, K * K, Cin, Cout)     # (B, K*K, Cin, Cout)
    if CoutP != Cout:
        w_fold = jnp.pad(w_fold, ((0, 0),) * 3 + ((0, CoutP - Cout),))
    w_fold = w_fold.astype(jnp.bfloat16)

    # ---- activation: NHWC, spatial zero pad, bf16 (MXU operand) ----
    x_pad = jnp.pad(jnp.transpose(x_nchw, (0, 2, 3, 1)).astype(f32),
                    ((0, 0), (pad, pad), (pad, pad), (0, 0))).astype(jnp.bfloat16)   # (B, Hp, Wp, Cin)

    # ---- noise pre-scaled by its weight; activation bias padded to CoutP ----
    noise_hw = (jnp.asarray(noise_w, f32) * noise_nchw.astype(f32)).reshape(B, H, W)
    bias = act_b.astype(f32)
    if CoutP != Cout:
        bias = jnp.pad(bias, (0, CoutP - Cout))
    bias = bias.reshape(1, CoutP)

    kernel = functools.partial(_styled_conv_kernel, TH, W, K, Cin, TCout)

    grid_spec = pltpu.PrefetchScalarGridSpec(
        num_scalar_prefetch=0,
        # r innermost: x slab resident across (co, r); weight tile resident across r.
        grid=(B, COT, RT),
        in_specs=[
            pl.BlockSpec((1, Hp, Wp, Cin), lambda b, co, r: (b, 0, 0, 0)),        # resident activation
            pl.BlockSpec((1, K * K, Cin, TCout), lambda b, co, r: (b, 0, 0, co)), # pre-folded weight (bf16)
            pl.BlockSpec((1, TH, W), lambda b, co, r: (b, r, 0)),                 # pre-scaled noise
            pl.BlockSpec((1, TCout), lambda b, co, r: (0, co)),                   # activation bias
        ],
        out_specs=pl.BlockSpec((1, TH, W, TCout), lambda b, co, r: (b, r, 0, co)),
    )

    out = pl.pallas_call(
        kernel,
        out_shape=jax.ShapeDtypeStruct((B, H, W, CoutP), out_dtype),
        grid_spec=grid_spec,
        compiler_params=pltpu.CompilerParams(
            dimension_semantics=("parallel", "parallel", "parallel"),
            vmem_limit_bytes=_vmem_limit_bytes(Hp, Wp, Cin, K, TH, W, TCout)),
    )(x_pad, w_fold, noise_hw, bias)

    out = out[..., :Cout]
    return jnp.transpose(out, (0, 3, 1, 2))  # back to NCHW


def _reference(x, style, params, noise):
    """Plain-JAX reference (NCHW), mirrors the PyTorch fused path."""
    conv_w = params["conv_weight"]
    mod_w = params["mod_weight"]
    mod_b = params["mod_bias"]
    noise_w = params["noise_weight"]
    act_b = params["act_bias"]

    B, Cin, H, W = x.shape
    Cout, _, K, _ = conv_w.shape
    SD = mod_w.shape[1]
    scale = 1.0 / math.sqrt(Cin * K * K)
    mod_scale = 1.0 / math.sqrt(SD)

    s = style @ (mod_w * mod_scale).T + mod_b                     # (B, Cin)
    weight = scale * conv_w[None] * s[:, None, :, None, None]     # (B, Cout, Cin, K, K)
    demod = jax.lax.rsqrt(jnp.sum(weight ** 2, axis=(2, 3, 4)) + 1e-8)
    weight = weight * demod[:, :, None, None, None]

    outs = []
    for b in range(B):
        o = jax.lax.conv_general_dilated(
            x[b:b + 1], weight[b], (1, 1),
            padding=[(K // 2, K // 2), (K // 2, K // 2)],
            dimension_numbers=("NCHW", "OIHW", "NCHW"),
            precision=jax.lax.Precision.HIGHEST)
        outs.append(o)
    out = jnp.concatenate(outs, axis=0)

    out = out + noise_w * noise                                   # (B,1,H,W) broadcast
    out = out + act_b[None, :, None, None]
    out = jnp.where(out >= 0, out, 0.2 * out) * math.sqrt(2.0)
    return out


if __name__ == "__main__":
    B, Cin, Cout, K, SD, H, W = 2, 4, 4, 3, 32, 16, 16

    key = jax.random.PRNGKey(0)
    kx, ks, kw, km, kn, kb = jax.random.split(key, 6)

    x = jax.random.normal(kx, (B, Cin, H, W), jnp.float32)
    style = jax.random.normal(ks, (B, SD), jnp.float32)

    params = dict(
        conv_weight=jax.random.normal(kw, (Cout, Cin, K, K), jnp.float32),
        mod_weight=jax.random.normal(km, (Cin, SD), jnp.float32),   # EqualLinear weight (lr_mul=1)
        mod_bias=jnp.ones((Cin,), jnp.float32),                     # bias_init = 1
        noise_weight=jnp.float32(0.1),                              # nonzero to exercise noise path
        act_bias=0.1 * jax.random.normal(kb, (Cout,), jnp.float32), # nonzero to exercise bias path
    )
    # noise1 is None in the default forward -> NoiseInjection draws N(0,1) noise;
    # drawn deterministically here and fed to the kernel.
    noise = jax.random.normal(kn, (B, 1, H, W), jnp.float32)

    out = styled_conv_forward(x, style, params, noise)
    out = jax.block_until_ready(out)

    ref = _reference(x, style, params, noise)
    assert out.shape == (B, Cout, H, W)
    err = float(jnp.max(jnp.abs(out - ref)))
    assert jnp.allclose(out, ref, atol=2e-2, rtol=2e-2), err

    print("KERNEL_OK")
</pallas_src>

<mosaic_0001>
module attributes {stable_mosaic.version = 11 : i64} {
  func.func @_styled_conv_kernel(%arg0: i32, %arg1: i32, %arg2: i32, %arg3: memref<1x18x18x4xbf16, #tpu.memory_space<vmem>>, %arg4: memref<1x9x4x128xbf16, #tpu.memory_space<vmem>>, %arg5: memref<1x16x16xf32, #tpu.memory_space<vmem>>, %arg6: memref<1x128xf32, #tpu.memory_space<vmem>>, %arg7: memref<1x16x16x128xf32, #tpu.memory_space<vmem>>) attributes {dimension_semantics = [#tpu.dimension_semantics<parallel>, #tpu.dimension_semantics<parallel>, #tpu.dimension_semantics<parallel>], iteration_bounds = array<i64: 2, 1, 1>, scalar_prefetch = 0 : i64, scratch_operands = 0 : i64, tpu.core_type = #tpu.core_type<tc>, window_params = [{transform_indices = @transform_0, window_bounds = array<i64: 1, 18, 18, 4>}, {transform_indices = @transform_1, window_bounds = array<i64: 1, 9, 4, 128>}, {transform_indices = @transform_2, window_bounds = array<i64: 1, 16, 16>}, {transform_indices = @transform_3, window_bounds = array<i64: 1, 128>}, {transform_indices = @transform_4, window_bounds = array<i64: 1, 16, 16, 128>}]} {
    %c16_i32 = arith.constant 16 : i32
    %0 = arith.muli %arg2, %c16_i32 : i32
    %1 = tpu.assume_multiple %0, 8 : i32
    %c0 = arith.constant 0 : index
    %2 = arith.index_cast %1 : i32 to index
    %c0_0 = arith.constant 0 : index
    %c0_1 = arith.constant 0 : index
    %3 = vector.load %arg3[%c0, %2, %c0_0, %c0_1] : memref<1x18x18x4xbf16, #tpu.memory_space<vmem>>, vector<1x18x16x4xbf16>
    %4 = vector.shape_cast %3 : vector<1x18x16x4xbf16> to vector<18x16x4xbf16>
    %5 = vector.shape_cast %4 : vector<18x16x4xbf16> to vector<288x4xbf16>
    %6 = vector.extract_strided_slice %5 {offsets = [0, 0], sizes = [256, 4], strides = [1, 1]} : vector<288x4xbf16> to vector<256x4xbf16>
    %c0_2 = arith.constant 0 : index
    %c0_3 = arith.constant 0 : index
    %c0_4 = arith.constant 0 : index
    %c0_5 = arith.constant 0 : index
    %7 = vector.load %arg4[%c0_2, %c0_3, %c0_4, %c0_5] : memref<1x9x4x128xbf16, #tpu.memory_space<vmem>>, vector<1x1x4x128xbf16>
    %8 = vector.shape_cast %7 : vector<1x1x4x128xbf16> to vector<4x128xbf16>
    %cst = arith.constant dense<0.000000e+00> : vector<256x128xf32>
    %9 = tpu.matmul %6, %8, %cst {dimension_numbers = #tpu.dot_dimension_numbers<[1], [0], [0], [1], [0, 0, 1, 1], [], []>} : vector<256x4xbf16>, vector<4x128xbf16>, vector<256x128xf32> -> vector<256x128xf32>
    %10 = vector.extract_strided_slice %5 {offsets = [16, 0], sizes = [256, 4], strides = [1, 1]} : vector<288x4xbf16> to vector<256x4xbf16>
    %c0_6 = arith.constant 0 : index
    %c3 = arith.constant 3 : index
    %c0_7 = arith.constant 0 : index
    %c0_8 = arith.constant 0 : index
    %11 = vector.load %arg4[%c0_6, %c3, %c0_7, %c0_8] : memref<1x9x4x128xbf16, #tpu.memory_space<vmem>>, vector<1x1x4x128xbf16>
    %12 = vector.shape_cast %11 : vector<1x1x4x128xbf16> to vector<4x128xbf16>
    %cst_9 = arith.constant dense<0.000000e+00> : vector<256x128xf32>
    %13 = tpu.matmul %10, %12, %cst_9 {dimension_numbers = #tpu.dot_dimension_numbers<[1], [0], [0], [1], [0, 0, 1, 1], [], []>} : vector<256x4xbf16>, vector<4x128xbf16>, vector<256x128xf32> -> vector<256x128xf32>
    %14 = arith.addf %9, %13 : vector<256x128xf32>
    %15 = vector.extract_strided_slice %5 {offsets = [32, 0], sizes = [256, 4], strides = [1, 1]} : vector<288x4xbf16> to vector<256x4xbf16>
    %c0_10 = arith.constant 0 : index
    %c6 = arith.constant 6 : index
    %c0_11 = arith.constant 0 : index
    %c0_12 = arith.constant 0 : index
    %16 = vector.load %arg4[%c0_10, %c6, %c0_11, %c0_12] : memref<1x9x4x128xbf16, #tpu.memory_space<vmem>>, vector<1x1x4x128xbf16>
    %17 = vector.shape_cast %16 : vector<1x1x4x128xbf16> to vector<4x128xbf16>
    %cst_13 = arith.constant dense<0.000000e+00> : vector<256x128xf32>
    %18 = tpu.matmul %15, %17, %cst_13 {dimension_numbers = #tpu.dot_dimension_numbers<[1], [0], [0], [1], [0, 0, 1, 1], [], []>} : vector<256x4xbf16>, vector<4x128xbf16>, vector<256x128xf32> -> vector<256x128xf32>
    %19 = arith.addf %14, %18 : vector<256x128xf32>
    %c0_14 = arith.constant 0 : index
    %20 = arith.index_cast %1 : i32 to index
    %c1 = arith.constant 1 : index
    %c0_15 = arith.constant 0 : index
    %21 = vector.load %arg3[%c0_14, %20, %c1, %c0_15] : memref<1x18x18x4xbf16, #tpu.memory_space<vmem>>, vector<1x18x16x4xbf16>
    %22 = vector.shape_cast %21 : vector<1x18x16x4xbf16> to vector<18x16x4xbf16>
    %23 = vector.shape_cast %22 : vector<18x16x4xbf16> to vector<288x4xbf16>
    %24 = vector.extract_strided_slice %23 {offsets = [0, 0], sizes = [256, 4], strides = [1, 1]} : vector<288x4xbf16> to vector<256x4xbf16>
    %c0_16 = arith.constant 0 : index
    %c1_17 = arith.constant 1 : index
    %c0_18 = arith.constant 0 : index
    %c0_19 = arith.constant 0 : index
    %25 = vector.load %arg4[%c0_16, %c1_17, %c0_18, %c0_19] : memref<1x9x4x128xbf16, #tpu.memory_space<vmem>>, vector<1x1x4x128xbf16>
    %26 = vector.shape_cast %25 : vector<1x1x4x128xbf16> to vector<4x128xbf16>
    %cst_20 = arith.constant dense<0.000000e+00> : vector<256x128xf32>
    %27 = tpu.matmul %24, %26, %cst_20 {dimension_numbers = #tpu.dot_dimension_numbers<[1], [0], [0], [1], [0, 0, 1, 1], [], []>} : vector<256x4xbf16>, vector<4x128xbf16>, vector<256x128xf32> -> vector<256x128xf32>
    %28 = arith.addf %19, %27 : vector<256x128xf32>
    %29 = vector.extract_strided_slice %23 {offsets = [16, 0], sizes = [256, 4], strides = [1, 1]} : vector<288x4xbf16> to vector<256x4xbf16>
    %c0_21 = arith.constant 0 : index
    %c4 = arith.constant 4 : index
    %c0_22 = arith.constant 0 : index
    %c0_23 = arith.constant 0 : index
    %30 = vector.load %arg4[%c0_21, %c4, %c0_22, %c0_23] : memref<1x9x4x128xbf16, #tpu.memory_space<vmem>>, vector<1x1x4x128xbf16>
    %31 = vector.shape_cast %30 : vector<1x1x4x128xbf16> to vector<4x128xbf16>
    %cst_24 = arith.constant dense<0.000000e+00> : vector<256x128xf32>
    %32 = tpu.matmul %29, %31, %cst_24 {dimension_numbers = #tpu.dot_dimension_numbers<[1], [0], [0], [1], [0, 0, 1, 1], [], []>} : vector<256x4xbf16>, vector<4x128xbf16>, vector<256x128xf32> -> vector<256x128xf32>
    %33 = arith.addf %28, %32 : vector<256x128xf32>
    %34 = vector.extract_strided_slice %23 {offsets = [32, 0], sizes = [256, 4], strides = [1, 1]} : vector<288x4xbf16> to vector<256x4xbf16>
    %c0_25 = arith.constant 0 : index
    %c7 = arith.constant 7 : index
    %c0_26 = arith.constant 0 : index
    %c0_27 = arith.constant 0 : index
    %35 = vector.load %arg4[%c0_25, %c7, %c0_26, %c0_27] : memref<1x9x4x128xbf16, #tpu.memory_space<vmem>>, vector<1x1x4x128xbf16>
    %36 = vector.shape_cast %35 : vector<1x1x4x128xbf16> to vector<4x128xbf16>
    %cst_28 = arith.constant dense<0.000000e+00> : vector<256x128xf32>
    %37 = tpu.matmul %34, %36, %cst_28 {dimension_numbers = #tpu.dot_dimension_numbers<[1], [0], [0], [1], [0, 0, 1, 1], [], []>} : vector<256x4xbf16>, vector<4x128xbf16>, vector<256x128xf32> -> vector<256x128xf32>
    %38 = arith.addf %33, %37 : vector<256x128xf32>
    %c0_29 = arith.constant 0 : index
    %39 = arith.index_cast %1 : i32 to index
    %c2 = arith.constant 2 : index
    %c0_30 = arith.constant 0 : index
    %40 = vector.load %arg3[%c0_29, %39, %c2, %c0_30] : memref<1x18x18x4xbf16, #tpu.memory_space<vmem>>, vector<1x18x16x4xbf16>
    %41 = vector.shape_cast %40 : vector<1x18x16x4xbf16> to vector<18x16x4xbf16>
    %42 = vector.shape_cast %41 : vector<18x16x4xbf16> to vector<288x4xbf16>
    %43 = vector.extract_strided_slice %42 {offsets = [0, 0], sizes = [256, 4], strides = [1, 1]} : vector<288x4xbf16> to vector<256x4xbf16>
    %c0_31 = arith.constant 0 : index
    %c2_32 = arith.constant 2 : index
    %c0_33 = arith.constant 0 : index
    %c0_34 = arith.constant 0 : index
    %44 = vector.load %arg4[%c0_31, %c2_32, %c0_33, %c0_34] : memref<1x9x4x128xbf16, #tpu.memory_space<vmem>>, vector<1x1x4x128xbf16>
    %45 = vector.shape_cast %44 : vector<1x1x4x128xbf16> to vector<4x128xbf16>
    %cst_35 = arith.constant dense<0.000000e+00> : vector<256x128xf32>
    %46 = tpu.matmul %43, %45, %cst_35 {dimension_numbers = #tpu.dot_dimension_numbers<[1], [0], [0], [1], [0, 0, 1, 1], [], []>} : vector<256x4xbf16>, vector<4x128xbf16>, vector<256x128xf32> -> vector<256x128xf32>
    %47 = arith.addf %38, %46 : vector<256x128xf32>
    %48 = vector.extract_strided_slice %42 {offsets = [16, 0], sizes = [256, 4], strides = [1, 1]} : vector<288x4xbf16> to vector<256x4xbf16>
    %c0_36 = arith.constant 0 : index
    %c5 = arith.constant 5 : index
    %c0_37 = arith.constant 0 : index
    %c0_38 = arith.constant 0 : index
    %49 = vector.load %arg4[%c0_36, %c5, %c0_37, %c0_38] : memref<1x9x4x128xbf16, #tpu.memory_space<vmem>>, vector<1x1x4x128xbf16>
    %50 = vector.shape_cast %49 : vector<1x1x4x128xbf16> to vector<4x128xbf16>
    %cst_39 = arith.constant dense<0.000000e+00> : vector<256x128xf32>
    %51 = tpu.matmul %48, %50, %cst_39 {dimension_numbers = #tpu.dot_dimension_numbers<[1], [0], [0], [1], [0, 0, 1, 1], [], []>} : vector<256x4xbf16>, vector<4x128xbf16>, vector<256x128xf32> -> vector<256x128xf32>
    %52 = arith.addf %47, %51 : vector<256x128xf32>
    %53 = vector.extract_strided_slice %42 {offsets = [32, 0], sizes = [256, 4], strides = [1, 1]} : vector<288x4xbf16> to vector<256x4xbf16>
    %c0_40 = arith.constant 0 : index
    %c8 = arith.constant 8 : index
    %c0_41 = arith.constant 0 : index
    %c0_42 = arith.constant 0 : index
    %54 = vector.load %arg4[%c0_40, %c8, %c0_41, %c0_42] : memref<1x9x4x128xbf16, #tpu.memory_space<vmem>>, vector<1x1x4x128xbf16>
    %55 = vector.shape_cast %54 : vector<1x1x4x128xbf16> to vector<4x128xbf16>
    %cst_43 = arith.constant dense<0.000000e+00> : vector<256x128xf32>
    %56 = tpu.matmul %53, %55, %cst_43 {dimension_numbers = #tpu.dot_dimension_numbers<[1], [0], [0], [1], [0, 0, 1, 1], [], []>} : vector<256x4xbf16>, vector<4x128xbf16>, vector<256x128xf32> -> vector<256x128xf32>
    %57 = arith.addf %52, %56 : vector<256x128xf32>
    %58 = vector.shape_cast %57 : vector<256x128xf32> to vector<16x16x128xf32>
    %c0_44 = arith.constant 0 : index
    %c0_45 = arith.constant 0 : index
    %c0_46 = arith.constant 0 : index
    %59 = vector.load %arg5[%c0_44, %c0_45, %c0_46] : memref<1x16x16xf32, #tpu.memory_space<vmem>>, vector<1x16x16xf32>
    %60 = vector.shape_cast %59 : vector<1x16x16xf32> to vector<16x16xf32>
    %61 = vector.shape_cast %60 : vector<16x16xf32> to vector<16x16x1xf32>
    %62 = vector.broadcast %61 : vector<16x16x1xf32> to vector<16x16x128xf32>
    %63 = arith.addf %58, %62 : vector<16x16x128xf32>
    %c0_47 = arith.constant 0 : index
    %c0_48 = arith.constant 0 : index
    %64 = vector.load %arg6[%c0_47, %c0_48] : memref<1x128xf32, #tpu.memory_space<vmem>>, vector<1x128xf32>
    %65 = vector.shape_cast %64 : vector<1x128xf32> to vector<1x1x128xf32>
    %66 = vector.broadcast %65 : vector<1x1x128xf32> to vector<16x16x128xf32>
    %67 = arith.addf %63, %66 : vector<16x16x128xf32>
    %cst_49 = arith.constant 0.000000e+00 : f32
    %68 = vector.broadcast %cst_49 : f32 to vector<16x16x128xf32>
    %69 = arith.cmpf oge, %67, %68 : vector<16x16x128xf32>
    %cst_50 = arith.constant 2.000000e-01 : f32
    %70 = vector.broadcast %cst_50 : f32 to vector<16x16x128xf32>
    %71 = arith.mulf %70, %67 : vector<16x16x128xf32>
    %72 = arith.select %69, %67, %71 : vector<16x16x128xi1>, vector<16x16x128xf32>
    %cst_51 = arith.constant 1.41421354 : f32
    %73 = vector.broadcast %cst_51 : f32 to vector<16x16x128xf32>
    %74 = arith.mulf %72, %73 : vector<16x16x128xf32>
    %c0_52 = arith.constant 0 : index
    %c0_53 = arith.constant 0 : index
    %c0_54 = arith.constant 0 : index
    %c0_55 = arith.constant 0 : index
    %75 = vector.load %arg7[%c0_52, %c0_53, %c0_54, %c0_55] : memref<1x16x16x128xf32, #tpu.memory_space<vmem>>, vector<1x16x16x128xf32>
    %76 = vector.shape_cast %75 : vector<1x16x16x128xf32> to vector<16x16x128xf32>
    %77 = vector.shape_cast %74 : vector<16x16x128xf32> to vector<1x16x16x128xf32>
    tpu.vector_store %arg7[%c0_52, %c0_53, %c0_54, %c0_55], %77 {strides = array<i32>} : memref<1x16x16x128xf32, #tpu.memory_space<vmem>>, vector<1x16x16x128xf32>,
    return
  }
  func.func @transform_0(%arg0: i32, %arg1: i32, %arg2: i32) -> (i32, i32, i32, i32) {
    %c0_i32 = arith.constant 0 : i32
    %c0_i32_0 = arith.constant 0 : i32
    %c0_i32_1 = arith.constant 0 : i32
    %c0_i32_2 = arith.constant 0 : i32
    return %arg0, %c0_i32, %c0_i32_0, %c0_i32_1 : i32, i32, i32, i32
  }
  func.func @transform_1(%arg0: i32, %arg1: i32, %arg2: i32) -> (i32, i32, i32, i32) {
    %c0_i32 = arith.constant 0 : i32
    %c0_i32_0 = arith.constant 0 : i32
    %c0_i32_1 = arith.constant 0 : i32
    return %arg0, %c0_i32, %c0_i32_0, %arg1 : i32, i32, i32, i32
  }
  func.func @transform_2(%arg0: i32, %arg1: i32, %arg2: i32) -> (i32, i32, i32) {
    %c0_i32 = arith.constant 0 : i32
    %c0_i32_0 = arith.constant 0 : i32
    return %arg0, %arg2, %c0_i32 : i32, i32, i32
  }
  func.func @transform_3(%arg0: i32, %arg1: i32, %arg2: i32) -> (i32, i32) {
    %c0_i32 = arith.constant 0 : i32
    %c0_i32_0 = arith.constant 0 : i32
    return %c0_i32, %arg1 : i32, i32
  }
  func.func @transform_4(%arg0: i32, %arg1: i32, %arg2: i32) -> (i32, i32, i32, i32) {
    %c0_i32 = arith.constant 0 : i32
    %c0_i32_0 = arith.constant 0 : i32
    return %arg0, %arg2, %c0_i32, %arg1 : i32, i32, i32, i32
  }
}

</mosaic_0001>

<llo_original>
// kernel: tpu_custom_call.1
$region0: #{tpu_custom_call.1}
  #allocation0 [shape = 'u32[]', space=smem, size = 0x4, offset = 0x4, fixed_abs, tag = 'smem constant byte address 0x4 - core index']
  #allocation1 [shape = 'u32[72,128]{1,0:T(1,128)}', space=vmem, size = 0x9000, scoped, tag = 'internal scratch']
  %s0 = inlined_call_operand.vmem [shape: bf16[2,18,18,4], index: 0, kind: input, shape index: {}]
  %s1 = inlined_call_operand.vmem [shape: bf16[2,9,4,128], index: 1, kind: input, shape index: {}]
  %s2 = inlined_call_operand.vmem [shape: f32[2,16,16], index: 2, kind: input, shape index: {}]
  %s3 = inlined_call_operand.vmem [shape: f32[1,128], index: 3, kind: input, shape index: {}]
  %s4 = inlined_call_operand.hbm [shape: f32[2,16,16,128], index: 4, kind: output, shape index: {}]
  %s5 = sld [smem:[#allocation0]]
  $region49: #{tpu_custom_call.1} parent=0
    _
  %s7 = ssub.s32 1, %s5
  %s8 = scalar_select 0, %s7, %s5
  $region1: #{tpu_custom_call.1} parent=0
    #allocation2 [shape = 'u8[262144]{0}', space=vmem, size = 0x40000, scoped, tag = 'output window, operand 0']
    #allocation3 [shape = 's32[2]{0}', space=sflag, size = 0x8, scoped, tag = 'scoped memory for tpu_custom_call.1']
    %9 = vsyncpa [#allocation3], 0
    %s10 = scalar_lea.sflag [#allocation3], 1
    %11 = vsyncpa %s10, 0
    loop: start=0, step=1, limit=4
    $region2: #{tpu_custom_call.1} parent=1 // loop_pre_header
      _
    $region3: #{tpu_custom_call.1} parent=1 // loop_header
      %s13 = sphi 0, %s17
      %p14 = scmp.ge.s32.totalorder %s13, 4
      %s20 = sphi 0, %s39
      %s21 = sphi 0, %s35
      %s22 = sphi 0, %s31
      %s23 = sphi 0, %s20
      %s24 = sphi 0, %s21
      %s25 = sphi 0, %s22
      %s26 = sphi 0, %s23
      %s27 = sphi 0, %s24
      %s28 = sphi 0, %s25
      %s42 = sphi 0, %s44
      %s45 = sphi 0, %s42
      %s46 = sphi 0, %s45
      %s62 = sphi 0, %s46
      %s70 = sphi 0, %s72
      %s73 = sphi 0, %s70
      %s74 = sphi 0, %s73
      %s90 = sphi 0, %s74
      %s98 = sphi 0, %s100
      %s101 = sphi 0, %s98
      %s102 = sphi 0, %s101
      %s118 = sphi 0, %s102
      %s124 = sphi 0, %s126
      %s127 = sphi 0, %s124
      %s128 = sphi 0, %s127
      %s144 = sphi 0, %s128
      %s154 = sphi 0, %s156
      %s157 = sphi 0, %s154
      %s158 = sphi 0, %s157
      %s174 = sphi 0, %s158
    $region4: #{tpu_custom_call.1} parent=1 // loop_header_branch
      %16 = sbr.rel (%p14) target = $region8
    $region5: #{tpu_custom_call.1} parent=1 // loop_body
      %s18 = ssub.s32 %s13, 1
      %s19 = ssub.s32 %s13, 2
      %s29 = sadd.s32 1, %s22
      %p30 = scmp.ge.s32.totalorder %s29, 1
      %s31 = scalar_select %p30, 0, %s29
      %s32 = sadd.s32 1, %s21
      %s33 = scalar_select %p30, %s32, %s21
      %p34 = scmp.ge.s32.totalorder %s33, 1
      %s35 = scalar_select %p34, 0, %s33
      %s36 = sadd.s32 1, %s20
      %s37 = scalar_select %p34, %s36, %s20
      %p38 = scmp.ge.s32.totalorder %s37, 2
      %s39 = scalar_select %p38, 0, %s37
      %s40 = ssub.s32 %s20, %s39
      %p41 = scmp.eq.s32.totalorder %s40, 0
      %s43 = sadd.s32 %s42, 1
      %s44 = scalar_select %p41, %s42, %s43
      %p47 = pneg %p41
      %p48 = scmp.eq.s32.totalorder %s13, 1
      %p49 = por %p47, %p48
      %p50 = scmp.ne.s32.totalorder %s42, %s45
      %p51 = scmp.eq.s32.totalorder %s13, 0
      %p52 = por %p50, %p51
      %p53 = scmp.ne.s32.totalorder %s42, %s45
      %p54 = scmp.eq.s32.totalorder %s18, 1
      %p55 = por %p53, %p54
      %p56 = scmp.ne.s32.totalorder %s45, %s46
      %p57 = scmp.eq.s32.totalorder %s18, 0
      %p58 = por %p56, %p57
      %p59 = scmp.ne.s32.totalorder %s45, %s46
      %p60 = scmp.eq.s32.totalorder %s19, 1
      %p61 = por %p59, %p60
      %p63 = scmp.ne.s32.totalorder %s46, %s62
      %p64 = scmp.eq.s32.totalorder %s19, 0
      %p65 = por %p63, %p64
      %s66 = ssub.s32 %s20, %s39
      %s67 = ssub.s32 %s21, %s35
      %s68 = sor.u32 %s66, %s67
      %p69 = scmp.eq.s32.totalorder %s68, 0
      %s71 = sadd.s32 %s70, 1
      %s72 = scalar_select %p69, %s70, %s71
      %p75 = pneg %p69
      %p76 = scmp.eq.s32.totalorder %s13, 1
      %p77 = por %p75, %p76
      %p78 = scmp.ne.s32.totalorder %s70, %s73
      %p79 = scmp.eq.s32.totalorder %s13, 0
      %p80 = por %p78, %p79
      %p81 = scmp.ne.s32.totalorder %s70, %s73
      %p82 = scmp.eq.s32.totalorder %s18, 1
      %p83 = por %p81, %p82
      %p84 = scmp.ne.s32.totalorder %s73, %s74
      %p85 = scmp.eq.s32.totalorder %s18, 0
      %p86 = por %p84, %p85
      %p87 = scmp.ne.s32.totalorder %s73, %s74
      %p88 = scmp.eq.s32.totalorder %s19, 1
      %p89 = por %p87, %p88
      %p91 = scmp.ne.s32.totalorder %s74, %s90
      %p92 = scmp.eq.s32.totalorder %s19, 0
      %p93 = por %p91, %p92
      %s94 = ssub.s32 %s20, %s39
      %s95 = ssub.s32 %s22, %s31
      %s96 = sor.u32 %s94, %s95
      %p97 = scmp.eq.s32.totalorder %s96, 0
      %s99 = sadd.s32 %s98, 1
      %s100 = scalar_select %p97, %s98, %s99
      %p103 = pneg %p97
      %p104 = scmp.eq.s32.totalorder %s13, 1
      %p105 = por %p103, %p104
      %p106 = scmp.ne.s32.totalorder %s98, %s101
      %p107 = scmp.eq.s32.totalorder %s13, 0
      %p108 = por %p106, %p107
      %p109 = scmp.ne.s32.totalorder %s98, %s101
      %p110 = scmp.eq.s32.totalorder %s18, 1
      %p111 = por %p109, %p110
      %p112 = scmp.ne.s32.totalorder %s101, %s102
      %p113 = scmp.eq.s32.totalorder %s18, 0
      %p114 = por %p112, %p113
      %p115 = scmp.ne.s32.totalorder %s101, %s102
      %p116 = scmp.eq.s32.totalorder %s19, 1
      %p117 = por %p115, %p116
      %p119 = scmp.ne.s32.totalorder %s102, %s118
      %p120 = scmp.eq.s32.totalorder %s19, 0
      %p121 = por %p119, %p120
      %s122 = ssub.s32 %s21, %s35
      %p123 = scmp.eq.s32.totalorder %s122, 0
      %s125 = sadd.s32 %s124, 1
      %s126 = scalar_select %p123, %s124, %s125
      %p129 = pneg %p123
      %p130 = scmp.eq.s32.totalorder %s13, 1
      %p131 = por %p129, %p130
      %p132 = scmp.ne.s32.totalorder %s124, %s127
      %p133 = scmp.eq.s32.totalorder %s13, 0
      %p134 = por %p132, %p133
      %p135 = scmp.ne.s32.totalorder %s124, %s127
      %p136 = scmp.eq.s32.totalorder %s18, 1
      %p137 = por %p135, %p136
      %p138 = scmp.ne.s32.totalorder %s127, %s128
      %p139 = scmp.eq.s32.totalorder %s18, 0
      %p140 = por %p138, %p139
      %p141 = scmp.ne.s32.totalorder %s127, %s128
      %p142 = scmp.eq.s32.totalorder %s19, 1
      %p143 = por %p141, %p142
      %p145 = scmp.ne.s32.totalorder %s128, %s144
      %p146 = scmp.eq.s32.totalorder %s19, 0
      %p147 = por %p145, %p146
      %s148 = ssub.s32 %s20, %s39
      %s149 = ssub.s32 %s22, %s31
      %s150 = sor.u32 %s148, %s149
      %s151 = ssub.s32 %s21, %s35
      %s152 = sor.u32 %s150, %s151
      %p153 = scmp.eq.s32.totalorder %s152, 0
      %s155 = sadd.s32 %s154, 1
      %s156 = scalar_select %p153, %s154, %s155
      %p159 = pneg %p153
      %p160 = scmp.eq.s32.totalorder %s13, 1
      %p161 = por %p159, %p160
      %p162 = scmp.ne.s32.totalorder %s154, %s157
      %p163 = scmp.eq.s32.totalorder %s13, 0
      %p164 = por %p162, %p163
      %p165 = scmp.ne.s32.totalorder %s154, %s157
      %p166 = scmp.eq.s32.totalorder %s18, 1
      %p167 = por %p165, %p166
      %p168 = scmp.ne.s32.totalorder %s157, %s158
      %p169 = scmp.eq.s32.totalorder %s18, 0
      %p170 = por %p168, %p169
      %p171 = scmp.ne.s32.totalorder %s157, %s158
      %p172 = scmp.eq.s32.totalorder %s19, 1
      %p173 = por %p171, %p172
      %p175 = scmp.ne.s32.totalorder %s158, %s174
      %p176 = scmp.eq.s32.totalorder %s19, 0
      %p177 = por %p175, %p176
      %p178 = scmp.le.s32.totalorder 1, %s13
      %p179 = scmp.lt.s32.totalorder %s13, 3
      %p180 = pnand %p178, %p179
      %p181 = pneg %p180
      // Predicated region
      $region9: #{tpu_custom_call.1} parent=5 // pred_check
        _
      $region10: #{tpu_custom_call.1} parent=5 // pred_check_branch
        %183 = sbr.rel (%p180) target = $region12
      $region11: #{tpu_custom_call.1} parent=5 // pred_region
        %s184 = ssub.s32 %s13, 1
        // Predicated region
        $region13: #{tpu_custom_call.1} parent=11 // pred_check
          %p185 = pneg %p140
        $region14: #{tpu_custom_call.1} parent=11 // pred_check_branch
          %187 = sbr.rel (%p185) target = $region16
        $region15: #{tpu_custom_call.1} parent=11 // pred_region
          %p188 = scmp.lt.s32.totalorder %s24, 0
          %s189 = scalar_select %p188, %s24, 0
          %s190 = scalar_lea.vmem %s3, %s189
        $region16: #{tpu_custom_call.1} parent=11 // pred_fallthru
          _
      $region12: #{tpu_custom_call.1} parent=5 // pred_fallthru
        _
      %p191 = scmp.lt.s32.totalorder %s13, 2
      // Predicated region
      $region17: #{tpu_custom_call.1} parent=5 // pred_check
        %p192 = pneg %p191
      $region18: #{tpu_custom_call.1} parent=5 // pred_check_branch
        %194 = sbr.rel (%p192) target = $region20
      $region19: #{tpu_custom_call.1} parent=5 // pred_region
        // Predicated region
        $region21: #{tpu_custom_call.1} parent=19 // pred_check
          %p195 = pneg %p52
        $region22: #{tpu_custom_call.1} parent=19 // pred_check_branch
          %197 = sbr.rel (%p195) target = $region24
        $region23: #{tpu_custom_call.1} parent=19 // pred_region
          %p198 = scmp.lt.s32.totalorder %s20, 1
          %s199 = scalar_select %p198, %s20, 1
          %s200 = smul.addr %s199, 54
          %s201 = smul.addr %s200, 4
          %s202 = scalar_lea.vmem %s0, %s201
        $region24: #{tpu_custom_call.1} parent=19 // pred_fallthru
          _
        // Predicated region
        $region25: #{tpu_custom_call.1} parent=19 // pred_check
          %p203 = pneg %p80
        $region26: #{tpu_custom_call.1} parent=19 // pred_check_branch
          %205 = sbr.rel (%p203) target = $region28
        $region27: #{tpu_custom_call.1} parent=19 // pred_region
          %p206 = scmp.lt.s32.totalorder %s20, 1
          %s207 = scalar_select %p206, %s20, 1
          %p208 = scmp.lt.s32.totalorder %s21, 0
          %s209 = scalar_select %p208, %s21, 0
          %s210 = smul.addr %s207, 9
          %s211 = sadd.s32 %s209, %s210
          %s212 = smul.addr %s211, 2
          %s213 = scalar_lea.vmem %s1, %s212
        $region28: #{tpu_custom_call.1} parent=19 // pred_fallthru
          _
        // Predicated region
        $region29: #{tpu_custom_call.1} parent=19 // pred_check
          %p214 = pneg %p108
        $region30: #{tpu_custom_call.1} parent=19 // pred_check_branch
          %216 = sbr.rel (%p214) target = $region32
        $region31: #{tpu_custom_call.1} parent=19 // pred_region
          %s217 = smul.u32 2, %s22
          %p218 = scmp.lt.s32.totalorder %s20, 1
          %s219 = scalar_select %p218, %s20, 1
          %p220 = scmp.lt.s32.totalorder %s217, 1
          %s221 = scalar_select %p220, %s217, 1
          %s222 = smul.addr %s219, 2
          %s223 = sadd.s32 %s221, %s222
          %s224 = smul.addr %s223, 8
          %s225 = scalar_lea.vmem %s2, %s224
          %s226 = smul.u32 2, %s22
        $region32: #{tpu_custom_call.1} parent=19 // pred_fallthru
          _
      $region20: #{tpu_custom_call.1} parent=5 // pred_fallthru
        _
      %p227 = scmp.le.s32.totalorder 1, %s13
      %p228 = scmp.lt.s32.totalorder %s13, 3
      %p229 = pnand %p227, %p228
      %p230 = pneg %p229
      // Predicated region
      $region33: #{tpu_custom_call.1} parent=5 // pred_check
        _
      $region34: #{tpu_custom_call.1} parent=5 // pred_check_branch
        %232 = sbr.rel (%p229) target = $region36
      $region35: #{tpu_custom_call.1} parent=5 // pred_region
        %s233 = ssub.s32 %s13, 1
        %p234 = scmp.lt.s32.totalorder %s23, 1
        %s235 = scalar_select %p234, %s23, 1
        %s236 = smul.addr %s235, 54
        %s237 = smul.addr %s236, 4
        %s238 = scalar_lea.vmem %s0, %s237
        %p239 = pneg %p58
        %p240 = pneg %p55
        %p241 = scmp.lt.s32.totalorder %s23, 1
        %s242 = scalar_select %p241, %s23, 1
        %p243 = scmp.lt.s32.totalorder %s24, 0
        %s244 = scalar_select %p243, %s24, 0
        %s245 = smul.addr %s242, 9
        %s246 = sadd.s32 %s244, %s245
        %s247 = smul.addr %s246, 2
        %s248 = scalar_lea.vmem %s1, %s247
        %p249 = pneg %p86
        %p250 = pneg %p83
        %s251 = smul.u32 2, %s25
        %p252 = scmp.lt.s32.totalorder %s23, 1
        %s253 = scalar_select %p252, %s23, 1
        %p254 = scmp.lt.s32.totalorder %s251, 1
        %s255 = scalar_select %p254, %s251, 1
        %s256 = smul.addr %s253, 2
        %s257 = sadd.s32 %s255, %s256
        %s258 = smul.addr %s257, 8
        %s259 = scalar_lea.vmem %s2, %s258
        %p260 = pneg %p114
        %p261 = pneg %p111
        %p262 = scmp.lt.s32.totalorder %s24, 0
        %s263 = scalar_select %p262, %s24, 0
        %s264 = scalar_lea.vmem %s3, %s263
        %p265 = pneg %p140
        %p266 = pneg %p137
        %p267 = pneg %p170
        %p268 = pneg %p167
        %s269 = sand.u32 %s157, 1
        %s270 = scalar_lea.sflag [#allocation3], %s269
        %s271 = sand.u32 %s157, 1
        %s272 = smul.addr %s271, 256
        %s273 = scalar_lea.vmem [#allocation2], %s272
        %p274 = scmp.lt.s32.totalorder %s23, 1
        %s275 = scalar_select %p274, %s23, 1
        %s276 = smul.addr %s275, 54
        %s277 = smul.addr %s276, 4
        %s278 = scalar_lea.vmem %s0, %s277
        %p279 = scmp.lt.s32.totalorder %s23, 1
        %s280 = scalar_select %p279, %s23, 1
        %p281 = scmp.lt.s32.totalorder %s24, 0
        %s282 = scalar_select %p281, %s24, 0
        %s283 = smul.addr %s280, 9
        %s284 = sadd.s32 %s282, %s283
        %s285 = smul.addr %s284, 2
        %s286 = scalar_lea.vmem %s1, %s285
        %s287 = smul.u32 2, %s25
        %p288 = scmp.lt.s32.totalorder %s23, 1
        %s289 = scalar_select %p288, %s23, 1
        %p290 = scmp.lt.s32.totalorder %s287, 1
        %s291 = scalar_select %p290, %s287, 1
        %s292 = smul.addr %s289, 2
        %s293 = sadd.s32 %s291, %s292
        %s294 = smul.addr %s293, 8
        %s295 = scalar_lea.vmem %s2, %s294
        %s296 = smul.u32 2, %s25
        %p297 = scmp.lt.s32.totalorder %s24, 0
        %s298 = scalar_select %p297, %s24, 0
        %s299 = scalar_lea.vmem %s3, %s298
        %s300 = smul.u32 16, %s25
        %s302 = smul.u32 %s25, 16
        %s303 = smul.u32 %s302, 3
        %s304 = smul.addr %s303, 4
        %s305 = scalar_lea.vmem %s278, %s304
        %v306 = vld [vmem:[%s305] sm:$0xf]
        %v307 = vld [vmem:[%s305 + $0x4] sm:$0xf]
        %v308 = vld [vmem:[%s305 + $0xc] sm:$0xf]
        %v309 = vld [vmem:[%s305 + $0x10] sm:$0xf]
        %v310 = vld [vmem:[%s305 + $0x18] sm:$0xf]
        %v311 = vld [vmem:[%s305 + $0x1c] sm:$0xf]
        %v312 = vld [vmem:[%s305 + $0x24] sm:$0xf]
        %v313 = vld [vmem:[%s305 + $0x28] sm:$0xf]
        %v314 = vld [vmem:[%s305 + $0x30] sm:$0xf]
        %v315 = vld [vmem:[%s305 + $0x34] sm:$0xf]
        %v316 = vld [vmem:[%s305 + $0x3c] sm:$0xf]
        %v317 = vld [vmem:[%s305 + $0x40] sm:$0xf]
        %v318 = vld [vmem:[%s305 + $0x48] sm:$0xf]
        %v319 = vld [vmem:[%s305 + $0x4c] sm:$0xf]
        %v320 = vld [vmem:[%s305 + $0x54] sm:$0xf]
        %v321 = vld [vmem:[%s305 + $0x58] sm:$0xf]
        %v322 = vld [vmem:[%s305 + $0x60] sm:$0xf]
        %v323 = vld [vmem:[%s305 + $0x64] sm:$0xf]
        %v324 = vld [vmem:[%s305 + $0x6c] sm:$0xf]
        %v325 = vld [vmem:[%s305 + $0x70] sm:$0xf]
        %v326 = vld [vmem:[%s305 + $0x78] sm:$0xf]
        %v327 = vld [vmem:[%s305 + $0x7c] sm:$0xf]
        %v328 = vld [vmem:[%s305 + $0x84] sm:$0xf]
        %v329 = vld [vmem:[%s305 + $0x88] sm:$0xf]
        %v330 = vld [vmem:[%s305 + $0x90] sm:$0xf]
        %v331 = vld [vmem:[%s305 + $0x94] sm:$0xf]
        %v332 = vld [vmem:[%s305 + $0x9c] sm:$0xf]
        %v333 = vld [vmem:[%s305 + $0xa0] sm:$0xf]
        %v334 = vld [vmem:[%s305 + $0xa8] sm:$0xf]
        %v335 = vld [vmem:[%s305 + $0xac] sm:$0xf]
        %v336 = vld [vmem:[%s305 + $0xb4] sm:$0xf]
        %v337 = vld [vmem:[%s305 + $0xb8] sm:$0xf]
        %v338 = vld [vmem:[%s305 + $0xc0] sm:$0xf]
        %v339 = vld [vmem:[%s305 + $0xc4] sm:$0xf]
        %v340 = vld [vmem:[%s305 + $0xcc] sm:$0xf]
        %v341 = vld [vmem:[%s305 + $0xd0] sm:$0xf]
        %v342 = vld [vmem:[%s286] sm:$0x3]
        %s343 = scalar_lea.vmem %s286, 6
        %v344 = vld [vmem:[%s343] sm:$0x3]
        %v377 = vunpack.c.l.b16 %v308
        %v378 = vunpack.c.l.b16 %v309
        %v379 = vunpack.c.l.b16 %v310
        %v380 = vunpack.c.l.b16 %v311
        %v381 = vunpack.c.l.b16 %v312
        %v382 = vunpack.c.l.b16 %v313
        %v383 = vunpack.c.l.b16 %v314
        %v384 = vunpack.c.l.b16 %v315
        %v385 = vunpack.c.l.b16 %v316
        %v386 = vunpack.c.l.b16 %v317
        %v387 = vunpack.c.l.b16 %v318
        %v388 = vunpack.c.l.b16 %v319
        %v389 = vunpack.c.l.b16 %v320
        %v390 = vunpack.c.l.b16 %v321
        %v391 = vunpack.c.l.b16 %v322
        %v392 = vunpack.c.l.b16 %v323
        %v393 = vunpack.c.l.b16 %v324
        %v394 = vunpack.c.l.b16 %v325
        %v395 = vunpack.c.l.b16 %v326
        %v396 = vunpack.c.l.b16 %v327
        %v397 = vunpack.c.l.b16 %v328
        %v398 = vunpack.c.l.b16 %v329
        %v399 = vunpack.c.l.b16 %v330
        %v400 = vunpack.c.l.b16 %v331
        %v401 = vunpack.c.l.b16 %v332
        %v402 = vunpack.c.l.b16 %v333
        %v403 = vunpack.c.l.b16 %v334
        %v404 = vunpack.c.l.b16 %v335
        %v405 = vunpack.c.l.b16 %v336
        %v406 = vunpack.c.l.b16 %v337
        %v407 = vunpack.c.l.b16 %v338
        %v408 = vunpack.c.l.b16 %v339
        %v409 = vpack.c.b16 %v378, %v377
        %v410 = vpack.c.b16 %v380, %v379
        %v411 = vpack.c.b16 %v382, %v381
        %v412 = vpack.c.b16 %v384, %v383
        %v413 = vpack.c.b16 %v386, %v385
        %v414 = vpack.c.b16 %v388, %v387
        %v415 = vpack.c.b16 %v390, %v389
        %v416 = vpack.c.b16 %v392, %v391
        %v417 = vpack.c.b16 %v394, %v393
        %v418 = vpack.c.b16 %v396, %v395
        %v419 = vpack.c.b16 %v398, %v397
        %v420 = vpack.c.b16 %v400, %v399
        %v421 = vpack.c.b16 %v402, %v401
        %v422 = vpack.c.b16 %v404, %v403
        %v423 = vpack.c.b16 %v406, %v405
        %v424 = vpack.c.b16 %v408, %v407
        %vm425 = vcmask 31744
        %v427 = vsel %vm425, %v409, 0
        %v430 = vsel %vm425, %v410, 0
        %v433 = vsel %vm425, %v411, 0
        %v436 = vsel %vm425, %v412, 0
        %v439 = vsel %vm425, %v413, 0
        %v442 = vsel %vm425, %v414, 0
        %v445 = vsel %vm425, %v415, 0
        %v448 = vsel %vm425, %v416, 0
        %v451 = vsel %vm425, %v417, 0
        %v454 = vsel %vm425, %v418, 0
        %v457 = vsel %vm425, %v419, 0
        %v460 = vsel %vm425, %v420, 0
        %v463 = vsel %vm425, %v421, 0
        %v466 = vsel %vm425, %v422, 0
        %v469 = vsel %vm425, %v423, 0
        %v472 = vsel %vm425, %v424, 0
        %vm474 = vcmask 1041408
        %v476 = vsel %vm474, %v344, 0
        %478 = vmatpush.bf16.msra.mxu0 0
        %479 = vmatpush.bf16.msra.mxu0 0
        %480 = vmatpush.bf16.msra.mxu0 0
        %481 = vmatpush.bf16.msra.mxu0 0
        %482 = vmatpush.bf16.msra.mxu0 0
        %483 = vmatpush.bf16.msra.mxu0 0
        %484 = vmatpush.bf16.msra.mxu0 0
        %485 = vmatpush.bf16.msra.mxu0 %v476
        %486 = vmatmul.bf16.gmra.mxu0 %v427
        %v487 = vpop.f32.mrf.mxu0
        %v488 = vadd.f32 0.0, %v487
        %v489 = vpop.f32.mrf.mxu0
        %v490 = vadd.f32 0.0, %v489
        %491 = vmatmul.bf16.gmra.mxu0 %v430
        %v492 = vpop.f32.mrf.mxu0
        %v493 = vadd.f32 0.0, %v492
        %v494 = vpop.f32.mrf.mxu0
        %v495 = vadd.f32 0.0, %v494
        %496 = vmatmul.bf16.gmra.mxu0 %v433
        %v497 = vpop.f32.mrf.mxu0
        %v498 = vadd.f32 0.0, %v497
        %v499 = vpop.f32.mrf.mxu0
        %v500 = vadd.f32 0.0, %v499
        %501 = vmatmul.bf16.gmra.mxu0 %v436
        %v502 = vpop.f32.mrf.mxu0
        %v503 = vadd.f32 0.0, %v502
        %v504 = vpop.f32.mrf.mxu0
        %v505 = vadd.f32 0.0, %v504
        %506 = vmatmul.bf16.gmra.mxu0 %v439
        %v507 = vpop.f32.mrf.mxu0
        %v508 = vadd.f32 0.0, %v507
        %v509 = vpop.f32.mrf.mxu0
        %v510 = vadd.f32 0.0, %v509
        %511 = vmatmul.bf16.gmra.mxu0 %v442
        %v512 = vpop.f32.mrf.mxu0
        %v513 = vadd.f32 0.0, %v512
        %v514 = vpop.f32.mrf.mxu0
        %v515 = vadd.f32 0.0, %v514
        %516 = vmatmul.bf16.gmra.mxu0 %v445
        %v517 = vpop.f32.mrf.mxu0
        %v518 = vadd.f32 0.0, %v517
        %v519 = vpop.f32.mrf.mxu0
        %v520 = vadd.f32 0.0, %v519
        %521 = vmatmul.bf16.gmra.mxu0 %v448
        %v522 = vpop.f32.mrf.mxu0
        %v523 = vadd.f32 0.0, %v522
        %v524 = vpop.f32.mrf.mxu0
        %v525 = vadd.f32 0.0, %v524
        %526 = vmatmul.bf16.gmra.mxu0 %v451
        %v527 = vpop.f32.mrf.mxu0
        %v528 = vadd.f32 0.0, %v527
        %v529 = vpop.f32.mrf.mxu0
        %v530 = vadd.f32 0.0, %v529
        %531 = vmatmul.bf16.gmra.mxu0 %v454
        %v532 = vpop.f32.mrf.mxu0
        %v533 = vadd.f32 0.0, %v532
        %v534 = vpop.f32.mrf.mxu0
        %v535 = vadd.f32 0.0, %v534
        %536 = vmatmul.bf16.gmra.mxu0 %v457
        %v537 = vpop.f32.mrf.mxu0
        %v538 = vadd.f32 0.0, %v537
        %v539 = vpop.f32.mrf.mxu0
        %v540 = vadd.f32 0.0, %v539
        %541 = vmatmul.bf16.gmra.mxu0 %v460
        %v542 = vpop.f32.mrf.mxu0
        %v543 = vadd.f32 0.0, %v542
        %v544 = vpop.f32.mrf.mxu0
        %v545 = vadd.f32 0.0, %v544
        %546 = vmatmul.bf16.gmra.mxu0 %v463
        %v547 = vpop.f32.mrf.mxu0
        %v548 = vadd.f32 0.0, %v547
        %v549 = vpop.f32.mrf.mxu0
        %v550 = vadd.f32 0.0, %v549
        %551 = vmatmul.bf16.gmra.mxu0 %v466
        %v552 = vpop.f32.mrf.mxu0
        %v553 = vadd.f32 0.0, %v552
        %v554 = vpop.f32.mrf.mxu0
        %v555 = vadd.f32 0.0, %v554
        %556 = vmatmul.bf16.gmra.mxu0 %v469
        %v557 = vpop.f32.mrf.mxu0
        %v558 = vadd.f32 0.0, %v557
        %v559 = vpop.f32.mrf.mxu0
        %v560 = vadd.f32 0.0, %v559
        %561 = vmatmul.bf16.gmra.mxu0 %v472
        %v562 = vpop.f32.mrf.mxu0
        %v563 = vadd.f32 0.0, %v562
        %v564 = vpop.f32.mrf.mxu0
        %v565 = vadd.f32 0.0, %v564
        %566 = vdwg.mxu0
        %v569 = vunpack.c.l.b16 %v306
        %v570 = vunpack.c.l.b16 %v307
        %v571 = vpack.c.b16 %v570, %v569
        %v573 = vsel %vm425, %v571, 0
        %v576 = vsel %vm474, %v342, 0
        %578 = vmatpush.bf16.msra.mxu0 0
        %579 = vmatpush.bf16.msra.mxu0 0
        %580 = vmatpush.bf16.msra.mxu0 0
        %581 = vmatpush.bf16.msra.mxu0 0
        %582 = vmatpush.bf16.msra.mxu0 0
        %583 = vmatpush.bf16.msra.mxu0 0
        %584 = vmatpush.bf16.msra.mxu0 0
        %585 = vmatpush.bf16.msra.mxu0 %v576
        %586 = vmatmul.bf16.gmra.mxu0 %v573
        %v587 = vpop.f32.mrf.mxu0
        %v588 = vadd.f32 %v488, %v587
        %v589 = vpop.f32.mrf.mxu0
        %v590 = vadd.f32 %v490, %v589
        %591 = vmatmul.bf16.gmra.mxu0 %v427
        %v592 = vpop.f32.mrf.mxu0
        %v593 = vadd.f32 %v493, %v592
        %v594 = vpop.f32.mrf.mxu0
        %v595 = vadd.f32 %v495, %v594
        %596 = vmatmul.bf16.gmra.mxu0 %v430
        %v597 = vpop.f32.mrf.mxu0
        %v598 = vadd.f32 %v498, %v597
        %v599 = vpop.f32.mrf.mxu0
        %v600 = vadd.f32 %v500, %v599
        %601 = vmatmul.bf16.gmra.mxu0 %v433
        %v602 = vpop.f32.mrf.mxu0
        %v603 = vadd.f32 %v503, %v602
        %v604 = vpop.f32.mrf.mxu0
        %v605 = vadd.f32 %v505, %v604
        %606 = vmatmul.bf16.gmra.mxu0 %v436
        %v607 = vpop.f32.mrf.mxu0
        %v608 = vadd.f32 %v508, %v607
        %v609 = vpop.f32.mrf.mxu0
        %v610 = vadd.f32 %v510, %v609
        %611 = vmatmul.bf16.gmra.mxu0 %v439
        %v612 = vpop.f32.mrf.mxu0
        %v613 = vadd.f32 %v513, %v612
        %v614 = vpop.f32.mrf.mxu0
        %v615 = vadd.f32 %v515, %v614
        %616 = vmatmul.bf16.gmra.mxu0 %v442
        %v617 = vpop.f32.mrf.mxu0
        %v618 = vadd.f32 %v518, %v617
        %v619 = vpop.f32.mrf.mxu0
        %v620 = vadd.f32 %v520, %v619
        %621 = vmatmul.bf16.gmra.mxu0 %v445
        %v622 = vpop.f32.mrf.mxu0
        %v623 = vadd.f32 %v523, %v622
        %v624 = vpop.f32.mrf.mxu0
        %v625 = vadd.f32 %v525, %v624
        %626 = vmatmul.bf16.gmra.mxu0 %v448
        %v627 = vpop.f32.mrf.mxu0
        %v628 = vadd.f32 %v528, %v627
        %v629 = vpop.f32.mrf.mxu0
        %v630 = vadd.f32 %v530, %v629
        %631 = vmatmul.bf16.gmra.mxu0 %v451
        %v632 = vpop.f32.mrf.mxu0
        %v633 = vadd.f32 %v533, %v632
        %v634 = vpop.f32.mrf.mxu0
        %v635 = vadd.f32 %v535, %v634
        %636 = vmatmul.bf16.gmra.mxu0 %v454
        %v637 = vpop.f32.mrf.mxu0
        %v638 = vadd.f32 %v538, %v637
        %v639 = vpop.f32.mrf.mxu0
        %v640 = vadd.f32 %v540, %v639
        %641 = vmatmul.bf16.gmra.mxu0 %v457
        %v642 = vpop.f32.mrf.mxu0
        %v643 = vadd.f32 %v543, %v642
        %v644 = vpop.f32.mrf.mxu0
        %v645 = vadd.f32 %v545, %v644
        %646 = vmatmul.bf16.gmra.mxu0 %v460
        %v647 = vpop.f32.mrf.mxu0
        %v648 = vadd.f32 %v548, %v647
        %v649 = vpop.f32.mrf.mxu0
        %v650 = vadd.f32 %v550, %v649
        %651 = vmatmul.bf16.gmra.mxu0 %v463
        %v652 = vpop.f32.mrf.mxu0
        %v653 = vadd.f32 %v553, %v652
        %v654 = vpop.f32.mrf.mxu0
        %v655 = vadd.f32 %v555, %v654
        %656 = vmatmul.bf16.gmra.mxu0 %v466
        %v657 = vpop.f32.mrf.mxu0
        %v658 = vadd.f32 %v558, %v657
        %v659 = vpop.f32.mrf.mxu0
        %v660 = vadd.f32 %v560, %v659
        %661 = vmatmul.bf16.gmra.mxu0 %v469
        %v662 = vpop.f32.mrf.mxu0
        %v663 = vadd.f32 %v563, %v662
        %v664 = vpop.f32.mrf.mxu0
        %v665 = vadd.f32 %v565, %v664
        %666 = vdwg.mxu0
        %s667 = scalar_lea.vmem %s286, 12
        %v668 = vld [vmem:[%s667] sm:$0x3]
        %v671 = vunpack.c.l.b16 %v340
        %v672 = vunpack.c.l.b16 %v341
        %v673 = vpack.c.b16 %v672, %v671
        %v675 = vsel %vm425, %v673, 0
        %v678 = vsel %vm474, %v668, 0
        %680 = vmatpush.bf16.msra.mxu0 0
        %681 = vmatpush.bf16.msra.mxu0 0
        %682 = vmatpush.bf16.msra.mxu0 0
        %683 = vmatpush.bf16.msra.mxu0 0
        %684 = vmatpush.bf16.msra.mxu0 0
        %685 = vmatpush.bf16.msra.mxu0 0
        %686 = vmatpush.bf16.msra.mxu0 0
        %687 = vmatpush.bf16.msra.mxu0 %v678
        %688 = vmatmul.bf16.gmra.mxu0 %v430
        %v689 = vpop.f32.mrf.mxu0
        %v690 = vadd.f32 0.0, %v689
        %v691 = vpop.f32.mrf.mxu0
        %v692 = vadd.f32 0.0, %v691
        %693 = vmatmul.bf16.gmra.mxu0 %v433
        %v694 = vpop.f32.mrf.mxu0
        %v695 = vadd.f32 0.0, %v694
        %v696 = vpop.f32.mrf.mxu0
        %v697 = vadd.f32 0.0, %v696
        %698 = vmatmul.bf16.gmra.mxu0 %v436
        %v699 = vpop.f32.mrf.mxu0
        %v700 = vadd.f32 0.0, %v699
        %v701 = vpop.f32.mrf.mxu0
        %v702 = vadd.f32 0.0, %v701
        %703 = vmatmul.bf16.gmra.mxu0 %v439
        %v704 = vpop.f32.mrf.mxu0
        %v705 = vadd.f32 0.0, %v704
        %v706 = vpop.f32.mrf.mxu0
        %v707 = vadd.f32 0.0, %v706
        %708 = vmatmul.bf16.gmra.mxu0 %v442
        %v709 = vpop.f32.mrf.mxu0
        %v710 = vadd.f32 0.0, %v709
        %v711 = vpop.f32.mrf.mxu0
        %v712 = vadd.f32 0.0, %v711
        %713 = vmatmul.bf16.gmra.mxu0 %v445
        %v714 = vpop.f32.mrf.mxu0
        %v715 = vadd.f32 0.0, %v714
        %v716 = vpop.f32.mrf.mxu0
        %v717 = vadd.f32 0.0, %v716
        %718 = vmatmul.bf16.gmra.mxu0 %v448
        %v719 = vpop.f32.mrf.mxu0
        %v720 = vadd.f32 0.0, %v719
        %v721 = vpop.f32.mrf.mxu0
        %v722 = vadd.f32 0.0, %v721
        %723 = vmatmul.bf16.gmra.mxu0 %v451
        %v724 = vpop.f32.mrf.mxu0
        %v725 = vadd.f32 0.0, %v724
        %v726 = vpop.f32.mrf.mxu0
        %v727 = vadd.f32 0.0, %v726
        %728 = vmatmul.bf16.gmra.mxu0 %v454
        %v729 = vpop.f32.mrf.mxu0
        %v730 = vadd.f32 0.0, %v729
        %v731 = vpop.f32.mrf.mxu0
        %v732 = vadd.f32 0.0, %v731
        %733 = vmatmul.bf16.gmra.mxu0 %v457
        %v734 = vpop.f32.mrf.mxu0
        %v735 = vadd.f32 0.0, %v734
        %v736 = vpop.f32.mrf.mxu0
        %v737 = vadd.f32 0.0, %v736
        %738 = vmatmul.bf16.gmra.mxu0 %v460
        %v739 = vpop.f32.mrf.mxu0
        %v740 = vadd.f32 0.0, %v739
        %v741 = vpop.f32.mrf.mxu0
        %v742 = vadd.f32 0.0, %v741
        %743 = vmatmul.bf16.gmra.mxu0 %v463
        %v744 = vpop.f32.mrf.mxu0
        %v745 = vadd.f32 0.0, %v744
        %v746 = vpop.f32.mrf.mxu0
        %v747 = vadd.f32 0.0, %v746
        %748 = vmatmul.bf16.gmra.mxu0 %v466
        %v749 = vpop.f32.mrf.mxu0
        %v750 = vadd.f32 0.0, %v749
        %v751 = vpop.f32.mrf.mxu0
        %v752 = vadd.f32 0.0, %v751
        %753 = vmatmul.bf16.gmra.mxu0 %v469
        %v754 = vpop.f32.mrf.mxu0
        %v755 = vadd.f32 0.0, %v754
        %v756 = vpop.f32.mrf.mxu0
        %v757 = vadd.f32 0.0, %v756
        %758 = vmatmul.bf16.gmra.mxu0 %v472
        %v759 = vpop.f32.mrf.mxu0
        %v760 = vadd.f32 0.0, %v759
        %v761 = vpop.f32.mrf.mxu0
        %v762 = vadd.f32 0.0, %v761
        %763 = vmatmul.bf16.gmra.mxu0 %v675
        %v764 = vpop.f32.mrf.mxu0
        %v765 = vadd.f32 0.0, %v764
        %v766 = vpop.f32.mrf.mxu0
        %v767 = vadd.f32 0.0, %v766
        %768 = vdwg.mxu0
        %v769 = vadd.f32 %v588, %v690
        %v770 = vadd.f32 %v590, %v692
        %v771 = vadd.f32 %v593, %v695
        %v772 = vadd.f32 %v595, %v697
        %v773 = vadd.f32 %v598, %v700
        %v774 = vadd.f32 %v600, %v702
        %v775 = vadd.f32 %v603, %v705
        %v776 = vadd.f32 %v605, %v707
        %v777 = vadd.f32 %v608, %v710
        %v778 = vadd.f32 %v610, %v712
        %v779 = vadd.f32 %v613, %v715
        %v780 = vadd.f32 %v615, %v717
        %v781 = vadd.f32 %v618, %v720
        %v782 = vadd.f32 %v620, %v722
        %v783 = vadd.f32 %v623, %v725
        %v784 = vadd.f32 %v625, %v727
        %v785 = vadd.f32 %v628, %v730
        %v786 = vadd.f32 %v630, %v732
        %v787 = vadd.f32 %v633, %v735
        %v788 = vadd.f32 %v635, %v737
        %v789 = vadd.f32 %v638, %v740
        %v790 = vadd.f32 %v640, %v742
        %v791 = vadd.f32 %v643, %v745
        %v792 = vadd.f32 %v645, %v747
        %v793 = vadd.f32 %v648, %v750
        %v794 = vadd.f32 %v650, %v752
        %v795 = vadd.f32 %v653, %v755
        %v796 = vadd.f32 %v655, %v757
        %v797 = vadd.f32 %v658, %v760
        %v798 = vadd.f32 %v660, %v762
        %v799 = vadd.f32 %v663, %v765
        %v800 = vadd.f32 %v665, %v767
        %v801 = vld [vmem:[%s305] sm:$0xf]
        %v802 = vld [vmem:[%s305 + $0x4] sm:$0xf]
        %v803 = vld [vmem:[%s305 + $0x8] sm:$0x1]
        %v804 = vld [vmem:[%s305 + $0xc] sm:$0xf]
        %v805 = vld [vmem:[%s305 + $0x10] sm:$0xf]
        %v806 = vld [vmem:[%s305 + $0x14] sm:$0x1]
        %v807 = vld [vmem:[%s305 + $0x18] sm:$0xf]
        %v808 = vld [vmem:[%s305 + $0x1c] sm:$0xf]
        %v809 = vld [vmem:[%s305 + $0x20] sm:$0x1]
        %v810 = vld [vmem:[%s305 + $0x24] sm:$0xf]
        %v811 = vld [vmem:[%s305 + $0x28] sm:$0xf]
        %v812 = vld [vmem:[%s305 + $0x2c] sm:$0x1]
        %v813 = vld [vmem:[%s305 + $0x30] sm:$0xf]
        %v814 = vld [vmem:[%s305 + $0x34] sm:$0xf]
        %v815 = vld [vmem:[%s305 + $0x38] sm:$0x1]
        %v816 = vld [vmem:[%s305 + $0x3c] sm:$0xf]
        %v817 = vld [vmem:[%s305 + $0x40] sm:$0xf]
        %v818 = vld [vmem:[%s305 + $0x44] sm:$0x1]
        %v819 = vld [vmem:[%s305 + $0x48] sm:$0xf]
        %v820 = vld [vmem:[%s305 + $0x4c] sm:$0xf]
        %v821 = vld [vmem:[%s305 + $0x50] sm:$0x1]
        %v822 = vld [vmem:[%s305 + $0x54] sm:$0xf]
        %v823 = vld [vmem:[%s305 + $0x58] sm:$0xf]
        %v824 = vld [vmem:[%s305 + $0x5c] sm:$0x1]
        %v825 = vld [vmem:[%s305 + $0x60] sm:$0xf]
        %v826 = vld [vmem:[%s305 + $0x64] sm:$0xf]
        %v827 = vld [vmem:[%s305 + $0x68] sm:$0x1]
        %v828 = vld [vmem:[%s305 + $0x6c] sm:$0xf]
        %v829 = vld [vmem:[%s305 + $0x70] sm:$0xf]
        %v830 = vld [vmem:[%s305 + $0x74] sm:$0x1]
        %v831 = vld [vmem:[%s305 + $0x78] sm:$0xf]
        %v832 = vld [vmem:[%s305 + $0x7c] sm:$0xf]
        %v833 = vld [vmem:[%s305 + $0x80] sm:$0x1]
        %v834 = vld [vmem:[%s305 + $0x84] sm:$0xf]
        %v835 = vld [vmem:[%s305 + $0x88] sm:$0xf]
        %v836 = vld [vmem:[%s305 + $0x8c] sm:$0x1]
        %v837 = vld [vmem:[%s305 + $0x90] sm:$0xf]
        %v838 = vld [vmem:[%s305 + $0x94] sm:$0xf]
        %v839 = vld [vmem:[%s305 + $0x98] sm:$0x1]
        %v840 = vld [vmem:[%s305 + $0x9c] sm:$0xf]
        %v841 = vld [vmem:[%s305 + $0xa0] sm:$0xf]
        %v842 = vld [vmem:[%s305 + $0xa4] sm:$0x1]
        %v843 = vld [vmem:[%s305 + $0xa8] sm:$0xf]
        %v844 = vld [vmem:[%s305 + $0xac] sm:$0xf]
        %v845 = vld [vmem:[%s305 + $0xb0] sm:$0x1]
        %v846 = vld [vmem:[%s305 + $0xb4] sm:$0xf]
        %v847 = vld [vmem:[%s305 + $0xb8] sm:$0xf]
        %v848 = vld [vmem:[%s305 + $0xbc] sm:$0x1]
        %v849 = vld [vmem:[%s305 + $0xc0] sm:$0xf]
        %v850 = vld [vmem:[%s305 + $0xc4] sm:$0xf]
        %v851 = vld [vmem:[%s305 + $0xc8] sm:$0x1]
        %v852 = vld [vmem:[%s305 + $0xcc] sm:$0xf]
        %v853 = vld [vmem:[%s305 + $0xd0] sm:$0xf]
        %v854 = vld [vmem:[%s305 + $0xd4] sm:$0x1]
        %vm855 = vsmask.f32 3328
        %vm856 = vsmask.f32 7440
        %vm857 = vmor %vm855, %vm856
        %v859 = vshrl.u32 %v801, 16
        %v861 = vrot.slane %v859, 4
        %v862 = vshll.u32 %v801, 16
        %v864 = vrot.slane %v862, 5
        %v865 = vor.u32 %v861, %v864
        %v866 = vrot.slane %v865, 4
        %v868 = vshll.u32 %v802, 16
        %v870 = vrot.slane %v868, 5
        %v871 = vsel %vm857, %v866, %v870
        %v872 = vshrl.u32 %v802, 16
        %v874 = vrot.slane %v872, 4
        %v875 = vor.u32 %v874, %v870
        %v876 = vrot.slane %v875, 4
        %v878 = vshll.u32 %v803, 16
        %v880 = vrot.slane %v878, 5
        %v881 = vsel %vm857, %v876, %v880
        %v883 = vshrl.u32 %v804, 16
        %v885 = vrot.slane %v883, 4
        %v886 = vshll.u32 %v804, 16
        %v888 = vrot.slane %v886, 5
        %v889 = vor.u32 %v885, %v888
        %v890 = vrot.slane %v889, 4
        %v892 = vshll.u32 %v805, 16
        %v894 = vrot.slane %v892, 5
        %v895 = vsel %vm857, %v890, %v894
        %v896 = vshrl.u32 %v805, 16
        %v898 = vrot.slane %v896, 4
        %v899 = vor.u32 %v898, %v894
        %v900 = vrot.slane %v899, 4
        %v902 = vshll.u32 %v806, 16
        %v904 = vrot.slane %v902, 5
        %v905 = vsel %vm857, %v900, %v904
        %v907 = vshrl.u32 %v807, 16
        %v909 = vrot.slane %v907, 4
        %v910 = vshll.u32 %v807, 16
        %v912 = vrot.slane %v910, 5
        %v913 = vor.u32 %v909, %v912
        %v914 = vrot.slane %v913, 4
        %v916 = vshll.u32 %v808, 16
        %v918 = vrot.slane %v916, 5
        %v919 = vsel %vm857, %v914, %v918
        %v920 = vshrl.u32 %v808, 16
        %v922 = vrot.slane %v920, 4
        %v923 = vor.u32 %v922, %v918
        %v924 = vrot.slane %v923, 4
        %v926 = vshll.u32 %v809, 16
        %v928 = vrot.slane %v926, 5
        %v929 = vsel %vm857, %v924, %v928
        %v931 = vshrl.u32 %v810, 16
        %v933 = vrot.slane %v931, 4
        %v934 = vshll.u32 %v810, 16
        %v936 = vrot.slane %v934, 5
        %v937 = vor.u32 %v933, %v936
        %v938 = vrot.slane %v937, 4
        %v940 = vshll.u32 %v811, 16
        %v942 = vrot.slane %v940, 5
        %v943 = vsel %vm857, %v938, %v942
        %v944 = vshrl.u32 %v811, 16
        %v946 = vrot.slane %v944, 4
        %v947 = vor.u32 %v946, %v942
        %v948 = vrot.slane %v947, 4
        %v950 = vshll.u32 %v812, 16
        %v952 = vrot.slane %v950, 5
        %v953 = vsel %vm857, %v948, %v952
        %v955 = vshrl.u32 %v813, 16
        %v957 = vrot.slane %v955, 4
        %v958 = vshll.u32 %v813, 16
        %v960 = vrot.slane %v958, 5
        %v961 = vor.u32 %v957, %v960
        %v962 = vrot.slane %v961, 4
        %v964 = vshll.u32 %v814, 16
        %v966 = vrot.slane %v964, 5
        %v967 = vsel %vm857, %v962, %v966
        %v968 = vshrl.u32 %v814, 16
        %v970 = vrot.slane %v968, 4
        %v971 = vor.u32 %v970, %v966
        %v972 = vrot.slane %v971, 4
        %v974 = vshll.u32 %v815, 16
        %v976 = vrot.slane %v974, 5
        %v977 = vsel %vm857, %v972, %v976
        %v979 = vshrl.u32 %v816, 16
        %v981 = vrot.slane %v979, 4
        %v982 = vshll.u32 %v816, 16
        %v984 = vrot.slane %v982, 5
        %v985 = vor.u32 %v981, %v984
        %v986 = vrot.slane %v985, 4
        %v988 = vshll.u32 %v817, 16
        %v990 = vrot.slane %v988, 5
        %v991 = vsel %vm857, %v986, %v990
        %v992 = vshrl.u32 %v817, 16
        %v994 = vrot.slane %v992, 4
        %v995 = vor.u32 %v994, %v990
        %v996 = vrot.slane %v995, 4
        %v998 = vshll.u32 %v818, 16
        %v1000 = vrot.slane %v998, 5
        %v1001 = vsel %vm857, %v996, %v1000
        %v1003 = vshrl.u32 %v819, 16
        %v1005 = vrot.slane %v1003, 4
        %v1006 = vshll.u32 %v819, 16
        %v1008 = vrot.slane %v1006, 5
        %v1009 = vor.u32 %v1005, %v1008
        %v1010 = vrot.slane %v1009, 4
        %v1012 = vshll.u32 %v820, 16
        %v1014 = vrot.slane %v1012, 5
        %v1015 = vsel %vm857, %v1010, %v1014
        %v1016 = vshrl.u32 %v820, 16
        %v1018 = vrot.slane %v1016, 4
        %v1019 = vor.u32 %v1018, %v1014
        %v1020 = vrot.slane %v1019, 4
        %v1022 = vshll.u32 %v821, 16
        %v1024 = vrot.slane %v1022, 5
        %v1025 = vsel %vm857, %v1020, %v1024
        %v1027 = vshrl.u32 %v822, 16
        %v1029 = vrot.slane %v1027, 4
        %v1030 = vshll.u32 %v822, 16
        %v1032 = vrot.slane %v1030, 5
        %v1033 = vor.u32 %v1029, %v1032
        %v1034 = vrot.slane %v1033, 4
        %v1036 = vshll.u32 %v823, 16
        %v1038 = vrot.slane %v1036, 5
        %v1039 = vsel %vm857, %v1034, %v1038
        %v1040 = vshrl.u32 %v823, 16
        %v1042 = vrot.slane %v1040, 4
        %v1043 = vor.u32 %v1042, %v1038
        %v1044 = vrot.slane %v1043, 4
        %v1046 = vshll.u32 %v824, 16
        %v1048 = vrot.slane %v1046, 5
        %v1049 = vsel %vm857, %v1044, %v1048
        %v1051 = vshrl.u32 %v825, 16
        %v1053 = vrot.slane %v1051, 4
        %v1054 = vshll.u32 %v825, 16
        %v1056 = vrot.slane %v1054, 5
        %v1057 = vor.u32 %v1053, %v1056
        %v1058 = vrot.slane %v1057, 4
        %v1060 = vshll.u32 %v826, 16
        %v1062 = vrot.slane %v1060, 5
        %v1063 = vsel %vm857, %v1058, %v1062
        %v1064 = vshrl.u32 %v826, 16
        %v1066 = vrot.slane %v1064, 4
        %v1067 = vor.u32 %v1066, %v1062
        %v1068 = vrot.slane %v1067, 4
        %v1070 = vshll.u32 %v827, 16
        %v1072 = vrot.slane %v1070, 5
        %v1073 = vsel %vm857, %v1068, %v1072
        %v1075 = vshrl.u32 %v828, 16
        %v1077 = vrot.slane %v1075, 4
        %v1078 = vshll.u32 %v828, 16
        %v1080 = vrot.slane %v1078, 5
        %v1081 = vor.u32 %v1077, %v1080
        %v1082 = vrot.slane %v1081, 4
        %v1084 = vshll.u32 %v829, 16
        %v1086 = vrot.slane %v1084, 5
        %v1087 = vsel %vm857, %v1082, %v1086
        %v1088 = vshrl.u32 %v829, 16
        %v1090 = vrot.slane %v1088, 4
        %v1091 = vor.u32 %v1090, %v1086
        %v1092 = vrot.slane %v1091, 4
        %v1094 = vshll.u32 %v830, 16
        %v1096 = vrot.slane %v1094, 5
        %v1097 = vsel %vm857, %v1092, %v1096
        %v1099 = vshrl.u32 %v831, 16
        %v1101 = vrot.slane %v1099, 4
        %v1102 = vshll.u32 %v831, 16
        %v1104 = vrot.slane %v1102, 5
        %v1105 = vor.u32 %v1101, %v1104
        %v1106 = vrot.slane %v1105, 4
        %v1108 = vshll.u32 %v832, 16
        %v1110 = vrot.slane %v1108, 5
        %v1111 = vsel %vm857, %v1106, %v1110
        %v1112 = vshrl.u32 %v832, 16
        %v1114 = vrot.slane %v1112, 4
        %v1115 = vor.u32 %v1114, %v1110
        %v1116 = vrot.slane %v1115, 4
        %v1118 = vshll.u32 %v833, 16
        %v1120 = vrot.slane %v1118, 5
        %v1121 = vsel %vm857, %v1116, %v1120
        %v1123 = vshrl.u32 %v834, 16
        %v1125 = vrot.slane %v1123, 4
        %v1126 = vshll.u32 %v834, 16
        %v1128 = vrot.slane %v1126, 5
        %v1129 = vor.u32 %v1125, %v1128
        %v1130 = vrot.slane %v1129, 4
        %v1132 = vshll.u32 %v835, 16
        %v1134 = vrot.slane %v1132, 5
        %v1135 = vsel %vm857, %v1130, %v1134
        %v1136 = vshrl.u32 %v835, 16
        %v1138 = vrot.slane %v1136, 4
        %v1139 = vor.u32 %v1138, %v1134
        %v1140 = vrot.slane %v1139, 4
        %v1142 = vshll.u32 %v836, 16
        %v1144 = vrot.slane %v1142, 5
        %v1145 = vsel %vm857, %v1140, %v1144
        %v1147 = vshrl.u32 %v837, 16
        %v1149 = vrot.slane %v1147, 4
        %v1150 = vshll.u32 %v837, 16
        %v1152 = vrot.slane %v1150, 5
        %v1153 = vor.u32 %v1149, %v1152
        %v1154 = vrot.slane %v1153, 4
        %v1156 = vshll.u32 %v838, 16
        %v1158 = vrot.slane %v1156, 5
        %v1159 = vsel %vm857, %v1154, %v1158
        %v1160 = vshrl.u32 %v838, 16
        %v1162 = vrot.slane %v1160, 4
        %v1163 = vor.u32 %v1162, %v1158
        %v1164 = vrot.slane %v1163, 4
        %v1166 = vshll.u32 %v839, 16
        %v1168 = vrot.slane %v1166, 5
        %v1169 = vsel %vm857, %v1164, %v1168
        %v1171 = vshrl.u32 %v840, 16
        %v1173 = vrot.slane %v1171, 4
        %v1174 = vshll.u32 %v840, 16
        %v1176 = vrot.slane %v1174, 5
        %v1177 = vor.u32 %v1173, %v1176
        %v1178 = vrot.slane %v1177, 4
        %v1180 = vshll.u32 %v841, 16
        %v1182 = vrot.slane %v1180, 5
        %v1183 = vsel %vm857, %v1178, %v1182
        %v1184 = vshrl.u32 %v841, 16
        %v1186 = vrot.slane %v1184, 4
        %v1187 = vor.u32 %v1186, %v1182
        %v1188 = vrot.slane %v1187, 4
        %v1190 = vshll.u32 %v842, 16
        %v1192 = vrot.slane %v1190, 5
        %v1193 = vsel %vm857, %v1188, %v1192
        %v1195 = vshrl.u32 %v843, 16
        %v1197 = vrot.slane %v1195, 4
        %v1198 = vshll.u32 %v843, 16
        %v1200 = vrot.slane %v1198, 5
        %v1201 = vor.u32 %v1197, %v1200
        %v1202 = vrot.slane %v1201, 4
        %v1204 = vshll.u32 %v844, 16
        %v1206 = vrot.slane %v1204, 5
        %v1207 = vsel %vm857, %v1202, %v1206
        %v1208 = vshrl.u32 %v844, 16
        %v1210 = vrot.slane %v1208, 4
        %v1211 = vor.u32 %v1210, %v1206
        %v1212 = vrot.slane %v1211, 4
        %v1214 = vshll.u32 %v845, 16
        %v1216 = vrot.slane %v1214, 5
        %v1217 = vsel %vm857, %v1212, %v1216
        %v1219 = vshrl.u32 %v846, 16
        %v1221 = vrot.slane %v1219, 4
        %v1222 = vshll.u32 %v846, 16
        %v1224 = vrot.slane %v1222, 5
        %v1225 = vor.u32 %v1221, %v1224
        %v1226 = vrot.slane %v1225, 4
        %v1228 = vshll.u32 %v847, 16
        %v1230 = vrot.slane %v1228, 5
        %v1231 = vsel %vm857, %v1226, %v1230
        %v1232 = vshrl.u32 %v847, 16
        %v1234 = vrot.slane %v1232, 4
        %v1235 = vor.u32 %v1234, %v1230
        %v1236 = vrot.slane %v1235, 4
        %v1238 = vshll.u32 %v848, 16
        %v1240 = vrot.slane %v1238, 5
        %v1241 = vsel %vm857, %v1236, %v1240
        %v1243 = vshrl.u32 %v849, 16
        %v1245 = vrot.slane %v1243, 4
        %v1246 = vshll.u32 %v849, 16
        %v1248 = vrot.slane %v1246, 5
        %v1249 = vor.u32 %v1245, %v1248
        %v1250 = vrot.slane %v1249, 4
        %v1252 = vshll.u32 %v850, 16
        %v1254 = vrot.slane %v1252, 5
        %v1255 = vsel %vm857, %v1250, %v1254
        %v1256 = vshrl.u32 %v850, 16
        %v1258 = vrot.slane %v1256, 4
        %v1259 = vor.u32 %v1258, %v1254
        %v1260 = vrot.slane %v1259, 4
        %v1262 = vshll.u32 %v851, 16
        %v1264 = vrot.slane %v1262, 5
        %v1265 = vsel %vm857, %v1260, %v1264
        %v1267 = vshrl.u32 %v852, 16
        %v1269 = vrot.slane %v1267, 4
        %v1270 = vshll.u32 %v852, 16
        %v1272 = vrot.slane %v1270, 5
        %v1273 = vor.u32 %v1269, %v1272
        %v1274 = vrot.slane %v1273, 4
        %v1276 = vshll.u32 %v853, 16
        %v1278 = vrot.slane %v1276, 5
        %v1279 = vsel %vm857, %v1274, %v1278
        %v1280 = vshrl.u32 %v853, 16
        %v1282 = vrot.slane %v1280, 4
        %v1283 = vor.u32 %v1282, %v1278
        %v1284 = vrot.slane %v1283, 4
        %v1286 = vshll.u32 %v854, 16
        %v1288 = vrot.slane %v1286, 5
        %v1289 = vsel %vm857, %v1284, %v1288
        %s1290 = scalar_lea.vmem %s286, 2
        %v1291 = vld [vmem:[%s1290] sm:$0x3]
        %v1292 = vunpack.c.l.b16 %v871
        %v1293 = vunpack.c.l.b16 %v881
        %v1294 = vunpack.c.l.b16 %v895
        %v1295 = vunpack.c.l.b16 %v905
        %v1296 = vunpack.c.l.b16 %v919
        %v1297 = vunpack.c.l.b16 %v929
        %v1298 = vunpack.c.l.b16 %v943
        %v1299 = vunpack.c.l.b16 %v953
        %v1300 = vunpack.c.l.b16 %v967
        %v1301 = vunpack.c.l.b16 %v977
        %v1302 = vunpack.c.l.b16 %v991
        %v1303 = vunpack.c.l.b16 %v1001
        %v1304 = vunpack.c.l.b16 %v1015
        %v1305 = vunpack.c.l.b16 %v1025
        %v1306 = vunpack.c.l.b16 %v1039
        %v1307 = vunpack.c.l.b16 %v1049
        %v1308 = vunpack.c.l.b16 %v1063
        %v1309 = vunpack.c.l.b16 %v1073
        %v1310 = vunpack.c.l.b16 %v1087
        %v1311 = vunpack.c.l.b16 %v1097
        %v1312 = vunpack.c.l.b16 %v1111
        %v1313 = vunpack.c.l.b16 %v1121
        %v1314 = vunpack.c.l.b16 %v1135
        %v1315 = vunpack.c.l.b16 %v1145
        %v1316 = vunpack.c.l.b16 %v1159
        %v1317 = vunpack.c.l.b16 %v1169
        %v1318 = vunpack.c.l.b16 %v1183
        %v1319 = vunpack.c.l.b16 %v1193
        %v1320 = vunpack.c.l.b16 %v1207
        %v1321 = vunpack.c.l.b16 %v1217
        %v1322 = vunpack.c.l.b16 %v1231
        %v1323 = vunpack.c.l.b16 %v1241
        %v1324 = vpack.c.b16 %v1293, %v1292
        %v1325 = vpack.c.b16 %v1295, %v1294
        %v1326 = vpack.c.b16 %v1297, %v1296
        %v1327 = vpack.c.b16 %v1299, %v1298
        %v1328 = vpack.c.b16 %v1301, %v1300
        %v1329 = vpack.c.b16 %v1303, %v1302
        %v1330 = vpack.c.b16 %v1305, %v1304
        %v1331 = vpack.c.b16 %v1307, %v1306
        %v1332 = vpack.c.b16 %v1309, %v1308
        %v1333 = vpack.c.b16 %v1311, %v1310
        %v1334 = vpack.c.b16 %v1313, %v1312
        %v1335 = vpack.c.b16 %v1315, %v1314
        %v1336 = vpack.c.b16 %v1317, %v1316
        %v1337 = vpack.c.b16 %v1319, %v1318
        %v1338 = vpack.c.b16 %v1321, %v1320
        %v1339 = vpack.c.b16 %v1323, %v1322
        %v1341 = vsel %vm425, %v1324, 0
        %v1344 = vsel %vm425, %v1325, 0
        %v1347 = vsel %vm425, %v1326, 0
        %v1350 = vsel %vm425, %v1327, 0
        %v1353 = vsel %vm425, %v1328, 0
        %v1356 = vsel %vm425, %v1329, 0
        %v1359 = vsel %vm425, %v1330, 0
        %v1362 = vsel %vm425, %v1331, 0
        %v1365 = vsel %vm425, %v1332, 0
        %v1368 = vsel %vm425, %v1333, 0
        %v1371 = vsel %vm425, %v1334, 0
        %v1374 = vsel %vm425, %v1335, 0
        %v1377 = vsel %vm425, %v1336, 0
        %v1380 = vsel %vm425, %v1337, 0
        %v1383 = vsel %vm425, %v1338, 0
        %v1386 = vsel %vm425, %v1339, 0
        %v1389 = vsel %vm474, %v1291, 0
        %1391 = vmatpush.bf16.msra.mxu0 0
        %1392 = vmatpush.bf16.msra.mxu0 0
        %1393 = vmatpush.bf16.msra.mxu0 0
        %1394 = vmatpush.bf16.msra.mxu0 0
        %1395 = vmatpush.bf16.msra.mxu0 0
        %1396 = vmatpush.bf16.msra.mxu0 0
        %1397 = vmatpush.bf16.msra.mxu0 0
        %1398 = vmatpush.bf16.msra.mxu0 %v1389
        %1399 = vmatmul.bf16.gmra.mxu0 %v1341
        %v1400 = vpop.f32.mrf.mxu0
        %v1401 = vadd.f32 0.0, %v1400
        %v1402 = vpop.f32.mrf.mxu0
        %v1403 = vadd.f32 0.0, %v1402
        %1404 = vmatmul.bf16.gmra.mxu0 %v1344
        %v1405 = vpop.f32.mrf.mxu0
        %v1406 = vadd.f32 0.0, %v1405
        %v1407 = vpop.f32.mrf.mxu0
        %v1408 = vadd.f32 0.0, %v1407
        %1409 = vmatmul.bf16.gmra.mxu0 %v1347
        %v1410 = vpop.f32.mrf.mxu0
        %v1411 = vadd.f32 0.0, %v1410
        %v1412 = vpop.f32.mrf.mxu0
        %v1413 = vadd.f32 0.0, %v1412
        %1414 = vmatmul.bf16.gmra.mxu0 %v1350
        %v1415 = vpop.f32.mrf.mxu0
        %v1416 = vadd.f32 0.0, %v1415
        %v1417 = vpop.f32.mrf.mxu0
        %v1418 = vadd.f32 0.0, %v1417
        %1419 = vmatmul.bf16.gmra.mxu0 %v1353
        %v1420 = vpop.f32.mrf.mxu0
        %v1421 = vadd.f32 0.0, %v1420
        %v1422 = vpop.f32.mrf.mxu0
        %v1423 = vadd.f32 0.0, %v1422
        %1424 = vmatmul.bf16.gmra.mxu0 %v1356
        %v1425 = vpop.f32.mrf.mxu0
        %v1426 = vadd.f32 0.0, %v1425
        %v1427 = vpop.f32.mrf.mxu0
        %v1428 = vadd.f32 0.0, %v1427
        %1429 = vmatmul.bf16.gmra.mxu0 %v1359
        %v1430 = vpop.f32.mrf.mxu0
        %v1431 = vadd.f32 0.0, %v1430
        %v1432 = vpop.f32.mrf.mxu0
        %v1433 = vadd.f32 0.0, %v1432
        %1434 = vmatmul.bf16.gmra.mxu0 %v1362
        %v1435 = vpop.f32.mrf.mxu0
        %v1436 = vadd.f32 0.0, %v1435
        %v1437 = vpop.f32.mrf.mxu0
        %v1438 = vadd.f32 0.0, %v1437
        %1439 = vmatmul.bf16.gmra.mxu0 %v1365
        %v1440 = vpop.f32.mrf.mxu0
        %v1441 = vadd.f32 0.0, %v1440
        %v1442 = vpop.f32.mrf.mxu0
        %v1443 = vadd.f32 0.0, %v1442
        %1444 = vmatmul.bf16.gmra.mxu0 %v1368
        %v1445 = vpop.f32.mrf.mxu0
        %v1446 = vadd.f32 0.0, %v1445
        %v1447 = vpop.f32.mrf.mxu0
        %v1448 = vadd.f32 0.0, %v1447
        %1449 = vmatmul.bf16.gmra.mxu0 %v1371
        %v1450 = vpop.f32.mrf.mxu0
        %v1451 = vadd.f32 0.0, %v1450
        %v1452 = vpop.f32.mrf.mxu0
        %v1453 = vadd.f32 0.0, %v1452
        %1454 = vmatmul.bf16.gmra.mxu0 %v1374
        %v1455 = vpop.f32.mrf.mxu0
        %v1456 = vadd.f32 0.0, %v1455
        %v1457 = vpop.f32.mrf.mxu0
        %v1458 = vadd.f32 0.0, %v1457
        %1459 = vmatmul.bf16.gmra.mxu0 %v1377
        %v1460 = vpop.f32.mrf.mxu0
        %v1461 = vadd.f32 0.0, %v1460
        %v1462 = vpop.f32.mrf.mxu0
        %v1463 = vadd.f32 0.0, %v1462
        %1464 = vmatmul.bf16.gmra.mxu0 %v1380
        %v1465 = vpop.f32.mrf.mxu0
        %v1466 = vadd.f32 0.0, %v1465
        %v1467 = vpop.f32.mrf.mxu0
        %v1468 = vadd.f32 0.0, %v1467
        %1469 = vmatmul.bf16.gmra.mxu0 %v1383
        %v1470 = vpop.f32.mrf.mxu0
        %v1471 = vadd.f32 0.0, %v1470
        %v1472 = vpop.f32.mrf.mxu0
        %v1473 = vadd.f32 0.0, %v1472
        %1474 = vmatmul.bf16.gmra.mxu0 %v1386
        %v1475 = vpop.f32.mrf.mxu0
        %v1476 = vadd.f32 0.0, %v1475
        %v1477 = vpop.f32.mrf.mxu0
        %v1478 = vadd.f32 0.0, %v1477
        %1479 = vdwg.mxu0
        %v1480 = vadd.f32 %v769, %v1401
        %v1481 = vadd.f32 %v770, %v1403
        %v1482 = vadd.f32 %v771, %v1406
        %v1483 = vadd.f32 %v772, %v1408
        %v1484 = vadd.f32 %v773, %v1411
        %v1485 = vadd.f32 %v774, %v1413
        %v1486 = vadd.f32 %v775, %v1416
        %v1487 = vadd.f32 %v776, %v1418
        %v1488 = vadd.f32 %v777, %v1421
        %v1489 = vadd.f32 %v778, %v1423
        %v1490 = vadd.f32 %v779, %v1426
        %v1491 = vadd.f32 %v780, %v1428
        %v1492 = vadd.f32 %v781, %v1431
        %v1493 = vadd.f32 %v782, %v1433
        %v1494 = vadd.f32 %v783, %v1436
        %v1495 = vadd.f32 %v784, %v1438
        %v1496 = vadd.f32 %v785, %v1441
        %v1497 = vadd.f32 %v786, %v1443
        %v1498 = vadd.f32 %v787, %v1446
        %v1499 = vadd.f32 %v788, %v1448
        %v1500 = vadd.f32 %v789, %v1451
        %v1501 = vadd.f32 %v790, %v1453
        %v1502 = vadd.f32 %v791, %v1456
        %v1503 = vadd.f32 %v792, %v1458
        %v1504 = vadd.f32 %v793, %v1461
        %v1505 = vadd.f32 %v794, %v1463
        %v1506 = vadd.f32 %v795, %v1466
        %v1507 = vadd.f32 %v796, %v1468
        %v1508 = vadd.f32 %v797, %v1471
        %v1509 = vadd.f32 %v798, %v1473
        %v1510 = vadd.f32 %v799, %v1476
        %v1511 = vadd.f32 %v800, %v1478
        %s1512 = scalar_lea.vmem %s286, 8
        %v1513 = vld [vmem:[%s1512] sm:$0x3]
        %v1514 = vunpack.c.l.b16 %v1255
        %v1515 = vunpack.c.l.b16 %v1265
        %v1516 = vpack.c.b16 %v1515, %v1514
        %v1518 = vsel %vm425, %v1516, 0
        %v1521 = vsel %vm474, %v1513, 0
        %1523 = vmatpush.bf16.msra.mxu0 0
        %1524 = vmatpush.bf16.msra.mxu0 0
        %1525 = vmatpush.bf16.msra.mxu0 0
        %1526 = vmatpush.bf16.msra.mxu0 0
        %1527 = vmatpush.bf16.msra.mxu0 0
        %1528 = vmatpush.bf16.msra.mxu0 0
        %1529 = vmatpush.bf16.msra.mxu0 0
        %1530 = vmatpush.bf16.msra.mxu0 %v1521
        %1531 = vmatmul.bf16.gmra.mxu0 %v1344
        %v1532 = vpop.f32.mrf.mxu0
        %v1533 = vadd.f32 0.0, %v1532
        %v1534 = vpop.f32.mrf.mxu0
        %v1535 = vadd.f32 0.0, %v1534
        %1536 = vmatmul.bf16.gmra.mxu0 %v1347
        %v1537 = vpop.f32.mrf.mxu0
        %v1538 = vadd.f32 0.0, %v1537
        %v1539 = vpop.f32.mrf.mxu0
        %v1540 = vadd.f32 0.0, %v1539
        %1541 = vmatmul.bf16.gmra.mxu0 %v1350
        %v1542 = vpop.f32.mrf.mxu0
        %v1543 = vadd.f32 0.0, %v1542
        %v1544 = vpop.f32.mrf.mxu0
        %v1545 = vadd.f32 0.0, %v1544
        %1546 = vmatmul.bf16.gmra.mxu0 %v1353
        %v1547 = vpop.f32.mrf.mxu0
        %v1548 = vadd.f32 0.0, %v1547
        %v1549 = vpop.f32.mrf.mxu0
        %v1550 = vadd.f32 0.0, %v1549
        %1551 = vmatmul.bf16.gmra.mxu0 %v1356
        %v1552 = vpop.f32.mrf.mxu0
        %v1553 = vadd.f32 0.0, %v1552
        %v1554 = vpop.f32.mrf.mxu0
        %v1555 = vadd.f32 0.0, %v1554
        %1556 = vmatmul.bf16.gmra.mxu0 %v1359
        %v1557 = vpop.f32.mrf.mxu0
        %v1558 = vadd.f32 0.0, %v1557
        %v1559 = vpop.f32.mrf.mxu0
        %v1560 = vadd.f32 0.0, %v1559
        %1561 = vmatmul.bf16.gmra.mxu0 %v1362
        %v1562 = vpop.f32.mrf.mxu0
        %v1563 = vadd.f32 0.0, %v1562
        %v1564 = vpop.f32.mrf.mxu0
        %v1565 = vadd.f32 0.0, %v1564
        %1566 = vmatmul.bf16.gmra.mxu0 %v1365
        %v1567 = vpop.f32.mrf.mxu0
        %v1568 = vadd.f32 0.0, %v1567
        %v1569 = vpop.f32.mrf.mxu0
        %v1570 = vadd.f32 0.0, %v1569
        %1571 = vmatmul.bf16.gmra.mxu0 %v1368
        %v1572 = vpop.f32.mrf.mxu0
        %v1573 = vadd.f32 0.0, %v1572
        %v1574 = vpop.f32.mrf.mxu0
        %v1575 = vadd.f32 0.0, %v1574
        %1576 = vmatmul.bf16.gmra.mxu0 %v1371
        %v1577 = vpop.f32.mrf.mxu0
        %v1578 = vadd.f32 0.0, %v1577
        %v1579 = vpop.f32.mrf.mxu0
        %v1580 = vadd.f32 0.0, %v1579
        %1581 = vmatmul.bf16.gmra.mxu0 %v1374
        %v1582 = vpop.f32.mrf.mxu0
        %v1583 = vadd.f32 0.0, %v1582
        %v1584 = vpop.f32.mrf.mxu0
        %v1585 = vadd.f32 0.0, %v1584
        %1586 = vmatmul.bf16.gmra.mxu0 %v1377
        %v1587 = vpop.f32.mrf.mxu0
        %v1588 = vadd.f32 0.0, %v1587
        %v1589 = vpop.f32.mrf.mxu0
        %v1590 = vadd.f32 0.0, %v1589
        %1591 = vmatmul.bf16.gmra.mxu0 %v1380
        %v1592 = vpop.f32.mrf.mxu0
        %v1593 = vadd.f32 0.0, %v1592
        %v1594 = vpop.f32.mrf.mxu0
        %v1595 = vadd.f32 0.0, %v1594
        %1596 = vmatmul.bf16.gmra.mxu0 %v1383
        %v1597 = vpop.f32.mrf.mxu0
        %v1598 = vadd.f32 0.0, %v1597
        %v1599 = vpop.f32.mrf.mxu0
        %v1600 = vadd.f32 0.0, %v1599
        %1601 = vmatmul.bf16.gmra.mxu0 %v1386
        %v1602 = vpop.f32.mrf.mxu0
        %v1603 = vadd.f32 0.0, %v1602
        %v1604 = vpop.f32.mrf.mxu0
        %v1605 = vadd.f32 0.0, %v1604
        %1606 = vmatmul.bf16.gmra.mxu0 %v1518
        %v1607 = vpop.f32.mrf.mxu0
        %v1608 = vadd.f32 0.0, %v1607
        %v1609 = vpop.f32.mrf.mxu0
        %v1610 = vadd.f32 0.0, %v1609
        %1611 = vdwg.mxu0
        %v1612 = vadd.f32 %v1480, %v1533
        %v1613 = vadd.f32 %v1481, %v1535
        %v1614 = vadd.f32 %v1482, %v1538
        %v1615 = vadd.f32 %v1483, %v1540
        %v1616 = vadd.f32 %v1484, %v1543
        %v1617 = vadd.f32 %v1485, %v1545
        %v1618 = vadd.f32 %v1486, %v1548
        %v1619 = vadd.f32 %v1487, %v1550
        %v1620 = vadd.f32 %v1488, %v1553
        %v1621 = vadd.f32 %v1489, %v1555
        %v1622 = vadd.f32 %v1490, %v1558
        %v1623 = vadd.f32 %v1491, %v1560
        %v1624 = vadd.f32 %v1492, %v1563
        %v1625 = vadd.f32 %v1493, %v1565
        %v1626 = vadd.f32 %v1494, %v1568
        %v1627 = vadd.f32 %v1495, %v1570
        %v1628 = vadd.f32 %v1496, %v1573
        %v1629 = vadd.f32 %v1497, %v1575
        %v1630 = vadd.f32 %v1498, %v1578
        %v1631 = vadd.f32 %v1499, %v1580
        %v1632 = vadd.f32 %v1500, %v1583
        %v1633 = vadd.f32 %v1501, %v1585
        %v1634 = vadd.f32 %v1502, %v1588
        %v1635 = vadd.f32 %v1503, %v1590
        %v1636 = vadd.f32 %v1504, %v1593
        %v1637 = vadd.f32 %v1505, %v1595
        %v1638 = vadd.f32 %v1506, %v1598
        %v1639 = vadd.f32 %v1507, %v1600
        %v1640 = vadd.f32 %v1508, %v1603
        %v1641 = vadd.f32 %v1509, %v1605
        %v1642 = vadd.f32 %v1510, %v1608
        %v1643 = vadd.f32 %v1511, %v1610
        %s1644 = scalar_lea.vmem %s286, 14
        %v1645 = vld [vmem:[%s1644] sm:$0x3]
        %v1646 = vunpack.c.l.b16 %v1279
        %v1647 = vunpack.c.l.b16 %v1289
        %v1648 = vpack.c.b16 %v1647, %v1646
        %v1650 = vsel %vm425, %v1648, 0
        %v1653 = vsel %vm474, %v1645, 0
        %1655 = vmatpush.bf16.msra.mxu0 0
        %1656 = vmatpush.bf16.msra.mxu0 0
        %1657 = vmatpush.bf16.msra.mxu0 0
        %1658 = vmatpush.bf16.msra.mxu0 0
        %1659 = vmatpush.bf16.msra.mxu0 0
        %1660 = vmatpush.bf16.msra.mxu0 0
        %1661 = vmatpush.bf16.msra.mxu0 0
        %1662 = vmatpush.bf16.msra.mxu0 %v1653
        %1663 = vmatmul.bf16.gmra.mxu0 %v1347
        %v1664 = vpop.f32.mrf.mxu0
        %v1665 = vadd.f32 0.0, %v1664
        %v1666 = vpop.f32.mrf.mxu0
        %v1667 = vadd.f32 0.0, %v1666
        %1668 = vmatmul.bf16.gmra.mxu0 %v1350
        %v1669 = vpop.f32.mrf.mxu0
        %v1670 = vadd.f32 0.0, %v1669
        %v1671 = vpop.f32.mrf.mxu0
        %v1672 = vadd.f32 0.0, %v1671
        %1673 = vmatmul.bf16.gmra.mxu0 %v1353
        %v1674 = vpop.f32.mrf.mxu0
        %v1675 = vadd.f32 0.0, %v1674
        %v1676 = vpop.f32.mrf.mxu0
        %v1677 = vadd.f32 0.0, %v1676
        %1678 = vmatmul.bf16.gmra.mxu0 %v1356
        %v1679 = vpop.f32.mrf.mxu0
        %v1680 = vadd.f32 0.0, %v1679
        %v1681 = vpop.f32.mrf.mxu0
        %v1682 = vadd.f32 0.0, %v1681
        %1683 = vmatmul.bf16.gmra.mxu0 %v1359
        %v1684 = vpop.f32.mrf.mxu0
        %v1685 = vadd.f32 0.0, %v1684
        %v1686 = vpop.f32.mrf.mxu0
        %v1687 = vadd.f32 0.0, %v1686
        %1688 = vmatmul.bf16.gmra.mxu0 %v1362
        %v1689 = vpop.f32.mrf.mxu0
        %v1690 = vadd.f32 0.0, %v1689
        %v1691 = vpop.f32.mrf.mxu0
        %v1692 = vadd.f32 0.0, %v1691
        %1693 = vmatmul.bf16.gmra.mxu0 %v1365
        %v1694 = vpop.f32.mrf.mxu0
        %v1695 = vadd.f32 0.0, %v1694
        %v1696 = vpop.f32.mrf.mxu0
        %v1697 = vadd.f32 0.0, %v1696
        %1698 = vmatmul.bf16.gmra.mxu0 %v1368
        %v1699 = vpop.f32.mrf.mxu0
        %v1700 = vadd.f32 0.0, %v1699
        %v1701 = vpop.f32.mrf.mxu0
        %v1702 = vadd.f32 0.0, %v1701
        %1703 = vmatmul.bf16.gmra.mxu0 %v1371
        %v1704 = vpop.f32.mrf.mxu0
        %v1705 = vadd.f32 0.0, %v1704
        %v1706 = vpop.f32.mrf.mxu0
        %v1707 = vadd.f32 0.0, %v1706
        %1708 = vmatmul.bf16.gmra.mxu0 %v1374
        %v1709 = vpop.f32.mrf.mxu0
        %v1710 = vadd.f32 0.0, %v1709
        %v1711 = vpop.f32.mrf.mxu0
        %v1712 = vadd.f32 0.0, %v1711
        %1713 = vmatmul.bf16.gmra.mxu0 %v1377
        %v1714 = vpop.f32.mrf.mxu0
        %v1715 = vadd.f32 0.0, %v1714
        %v1716 = vpop.f32.mrf.mxu0
        %v1717 = vadd.f32 0.0, %v1716
        %1718 = vmatmul.bf16.gmra.mxu0 %v1380
        %v1719 = vpop.f32.mrf.mxu0
        %v1720 = vadd.f32 0.0, %v1719
        %v1721 = vpop.f32.mrf.mxu0
        %v1722 = vadd.f32 0.0, %v1721
        %1723 = vmatmul.bf16.gmra.mxu0 %v1383
        %v1724 = vpop.f32.mrf.mxu0
        %v1725 = vadd.f32 0.0, %v1724
        %v1726 = vpop.f32.mrf.mxu0
        %v1727 = vadd.f32 0.0, %v1726
        %1728 = vmatmul.bf16.gmra.mxu0 %v1386
        %v1729 = vpop.f32.mrf.mxu0
        %v1730 = vadd.f32 0.0, %v1729
        %v1731 = vpop.f32.mrf.mxu0
        %v1732 = vadd.f32 0.0, %v1731
        %1733 = vmatmul.bf16.gmra.mxu0 %v1518
        %v1734 = vpop.f32.mrf.mxu0
        %v1735 = vadd.f32 0.0, %v1734
        %v1736 = vpop.f32.mrf.mxu0
        %v1737 = vadd.f32 0.0, %v1736
        %1738 = vmatmul.bf16.gmra.mxu0 %v1650
        %v1739 = vpop.f32.mrf.mxu0
        %v1740 = vadd.f32 0.0, %v1739
        %v1741 = vpop.f32.mrf.mxu0
        %v1742 = vadd.f32 0.0, %v1741
        %1743 = vdwg.mxu0
        %v1744 = vadd.f32 %v1612, %v1665
        %v1745 = vadd.f32 %v1613, %v1667
        %v1746 = vadd.f32 %v1614, %v1670
        %v1747 = vadd.f32 %v1615, %v1672
        %v1748 = vadd.f32 %v1616, %v1675
        %v1749 = vadd.f32 %v1617, %v1677
        %v1750 = vadd.f32 %v1618, %v1680
        %v1751 = vadd.f32 %v1619, %v1682
        %v1752 = vadd.f32 %v1620, %v1685
        %v1753 = vadd.f32 %v1621, %v1687
        %v1754 = vadd.f32 %v1622, %v1690
        %v1755 = vadd.f32 %v1623, %v1692
        %v1756 = vadd.f32 %v1624, %v1695
        %v1757 = vadd.f32 %v1625, %v1697
        %v1758 = vadd.f32 %v1626, %v1700
        %v1759 = vadd.f32 %v1627, %v1702
        %v1760 = vadd.f32 %v1628, %v1705
        %v1761 = vadd.f32 %v1629, %v1707
        %v1762 = vadd.f32 %v1630, %v1710
        %v1763 = vadd.f32 %v1631, %v1712
        %v1764 = vadd.f32 %v1632, %v1715
        %v1765 = vadd.f32 %v1633, %v1717
        %v1766 = vadd.f32 %v1634, %v1720
        %v1767 = vadd.f32 %v1635, %v1722
        %v1768 = vadd.f32 %v1636, %v1725
        %v1769 = vadd.f32 %v1637, %v1727
        %v1770 = vadd.f32 %v1638, %v1730
        %v1771 = vadd.f32 %v1639, %v1732
        %v1772 = vadd.f32 %v1640, %v1735
        %v1773 = vadd.f32 %v1641, %v1737
        %v1774 = vadd.f32 %v1642, %v1740
        %v1775 = vadd.f32 %v1643, %v1742
        %v1776 = vld [vmem:[%s305] sm:$0xe]
        %v1777 = vld [vmem:[%s305 + $0xc] sm:$0xe]
        %v1778 = vld [vmem:[%s305 + $0x18] sm:$0xe]
        %v1779 = vld [vmem:[%s305 + $0x24] sm:$0xe]
        %v1780 = vld [vmem:[%s305 + $0x30] sm:$0xe]
        %v1781 = vld [vmem:[%s305 + $0x3c] sm:$0xe]
        %v1782 = vld [vmem:[%s305 + $0x48] sm:$0xe]
        %v1783 = vld [vmem:[%s305 + $0x54] sm:$0xe]
        %v1784 = vld [vmem:[%s305 + $0x60] sm:$0xe]
        %v1785 = vld [vmem:[%s305 + $0x6c] sm:$0xe]
        %v1786 = vld [vmem:[%s305 + $0x78] sm:$0xe]
        %v1787 = vld [vmem:[%s305 + $0x84] sm:$0xe]
        %v1788 = vld [vmem:[%s305 + $0x90] sm:$0xe]
        %v1789 = vld [vmem:[%s305 + $0x9c] sm:$0xe]
        %v1790 = vld [vmem:[%s305 + $0xa8] sm:$0xe]
        %v1791 = vld [vmem:[%s305 + $0xb4] sm:$0xe]
        %v1792 = vld [vmem:[%s305 + $0xc0] sm:$0xe]
        %v1793 = vld [vmem:[%s305 + $0xcc] sm:$0xe]
        %vm1848 = vcmask 1042432
        %vm1849 = vcmask 1046532
        %vm1850 = vmor %vm1848, %vm1849
        %v1851 = vrot.slane %v1776, 5
        %v1852 = vrot.slane %v1851, 4
        %v1853 = vrot.slane %v802, 5
        %v1854 = vsel %vm1850, %v1852, %v1853
        %v1855 = vrot.slane %v1853, 4
        %v1856 = vrot.slane %v803, 5
        %v1857 = vsel %vm1850, %v1855, %v1856
        %v1858 = vrot.slane %v1777, 5
        %v1859 = vrot.slane %v1858, 4
        %v1860 = vrot.slane %v805, 5
        %v1861 = vsel %vm1850, %v1859, %v1860
        %v1862 = vrot.slane %v1860, 4
        %v1863 = vrot.slane %v806, 5
        %v1864 = vsel %vm1850, %v1862, %v1863
        %v1865 = vrot.slane %v1778, 5
        %v1866 = vrot.slane %v1865, 4
        %v1867 = vrot.slane %v808, 5
        %v1868 = vsel %vm1850, %v1866, %v1867
        %v1869 = vrot.slane %v1867, 4
        %v1870 = vrot.slane %v809, 5
        %v1871 = vsel %vm1850, %v1869, %v1870
        %v1872 = vrot.slane %v1779, 5
        %v1873 = vrot.slane %v1872, 4
        %v1874 = vrot.slane %v811, 5
        %v1875 = vsel %vm1850, %v1873, %v1874
        %v1876 = vrot.slane %v1874, 4
        %v1877 = vrot.slane %v812, 5
        %v1878 = vsel %vm1850, %v1876, %v1877
        %v1879 = vrot.slane %v1780, 5
        %v1880 = vrot.slane %v1879, 4
        %v1881 = vrot.slane %v814, 5
        %v1882 = vsel %vm1850, %v1880, %v1881
        %v1883 = vrot.slane %v1881, 4
        %v1884 = vrot.slane %v815, 5
        %v1885 = vsel %vm1850, %v1883, %v1884
        %v1886 = vrot.slane %v1781, 5
        %v1887 = vrot.slane %v1886, 4
        %v1888 = vrot.slane %v817, 5
        %v1889 = vsel %vm1850, %v1887, %v1888
        %v1890 = vrot.slane %v1888, 4
        %v1891 = vrot.slane %v818, 5
        %v1892 = vsel %vm1850, %v1890, %v1891
        %v1893 = vrot.slane %v1782, 5
        %v1894 = vrot.slane %v1893, 4
        %v1895 = vrot.slane %v820, 5
        %v1896 = vsel %vm1850, %v1894, %v1895
        %v1897 = vrot.slane %v1895, 4
        %v1898 = vrot.slane %v821, 5
        %v1899 = vsel %vm1850, %v1897, %v1898
        %v1900 = vrot.slane %v1783, 5
        %v1901 = vrot.slane %v1900, 4
        %v1902 = vrot.slane %v823, 5
        %v1903 = vsel %vm1850, %v1901, %v1902
        %v1904 = vrot.slane %v1902, 4
        %v1905 = vrot.slane %v824, 5
        %v1906 = vsel %vm1850, %v1904, %v1905
        %v1907 = vrot.slane %v1784, 5
        %v1908 = vrot.slane %v1907, 4
        %v1909 = vrot.slane %v826, 5
        %v1910 = vsel %vm1850, %v1908, %v1909
        %v1911 = vrot.slane %v1909, 4
        %v1912 = vrot.slane %v827, 5
        %v1913 = vsel %vm1850, %v1911, %v1912
        %v1914 = vrot.slane %v1785, 5
        %v1915 = vrot.slane %v1914, 4
        %v1916 = vrot.slane %v829, 5
        %v1917 = vsel %vm1850, %v1915, %v1916
        %v1918 = vrot.slane %v1916, 4
        %v1919 = vrot.slane %v830, 5
        %v1920 = vsel %vm1850, %v1918, %v1919
        %v1921 = vrot.slane %v1786, 5
        %v1922 = vrot.slane %v1921, 4
        %v1923 = vrot.slane %v832, 5
        %v1924 = vsel %vm1850, %v1922, %v1923
        %v1925 = vrot.slane %v1923, 4
        %v1926 = vrot.slane %v833, 5
        %v1927 = vsel %vm1850, %v1925, %v1926
        %v1928 = vrot.slane %v1787, 5
        %v1929 = vrot.slane %v1928, 4
        %v1930 = vrot.slane %v835, 5
        %v1931 = vsel %vm1850, %v1929, %v1930
        %v1932 = vrot.slane %v1930, 4
        %v1933 = vrot.slane %v836, 5
        %v1934 = vsel %vm1850, %v1932, %v1933
        %v1935 = vrot.slane %v1788, 5
        %v1936 = vrot.slane %v1935, 4
        %v1937 = vrot.slane %v838, 5
        %v1938 = vsel %vm1850, %v1936, %v1937
        %v1939 = vrot.slane %v1937, 4
        %v1940 = vrot.slane %v839, 5
        %v1941 = vsel %vm1850, %v1939, %v1940
        %v1942 = vrot.slane %v1789, 5
        %v1943 = vrot.slane %v1942, 4
        %v1944 = vrot.slane %v841, 5
        %v1945 = vsel %vm1850, %v1943, %v1944
        %v1946 = vrot.slane %v1944, 4
        %v1947 = vrot.slane %v842, 5
        %v1948 = vsel %vm1850, %v1946, %v1947
        %v1949 = vrot.slane %v1790, 5
        %v1950 = vrot.slane %v1949, 4
        %v1951 = vrot.slane %v844, 5
        %v1952 = vsel %vm1850, %v1950, %v1951
        %v1953 = vrot.slane %v1951, 4
        %v1954 = vrot.slane %v845, 5
        %v1955 = vsel %vm1850, %v1953, %v1954
        %v1956 = vrot.slane %v1791, 5
        %v1957 = vrot.slane %v1956, 4
        %v1958 = vrot.slane %v847, 5
        %v1959 = vsel %vm1850, %v1957, %v1958
        %v1960 = vrot.slane %v1958, 4
        %v1961 = vrot.slane %v848, 5
        %v1962 = vsel %vm1850, %v1960, %v1961
        %v1963 = vrot.slane %v1792, 5
        %v1964 = vrot.slane %v1963, 4
        %v1965 = vrot.slane %v850, 5
        %v1966 = vsel %vm1850, %v1964, %v1965
        %v1967 = vrot.slane %v1965, 4
        %v1968 = vrot.slane %v851, 5
        %v1969 = vsel %vm1850, %v1967, %v1968
        %v1970 = vrot.slane %v1793, 5
        %v1971 = vrot.slane %v1970, 4
        %v1972 = vrot.slane %v853, 5
        %v1973 = vsel %vm1850, %v1971, %v1972
        %v1974 = vrot.slane %v1972, 4
        %v1975 = vrot.slane %v854, 5
        %v1976 = vsel %vm1850, %v1974, %v1975
        %s1977 = scalar_lea.vmem %s286, 4
        %v1978 = vld [vmem:[%s1977] sm:$0x3]
        %v1979 = vunpack.c.l.b16 %v1854
        %v1980 = vunpack.c.l.b16 %v1857
        %v1981 = vunpack.c.l.b16 %v1861
        %v1982 = vunpack.c.l.b16 %v1864
        %v1983 = vunpack.c.l.b16 %v1868
        %v1984 = vunpack.c.l.b16 %v1871
        %v1985 = vunpack.c.l.b16 %v1875
        %v1986 = vunpack.c.l.b16 %v1878
        %v1987 = vunpack.c.l.b16 %v1882
        %v1988 = vunpack.c.l.b16 %v1885
        %v1989 = vunpack.c.l.b16 %v1889
        %v1990 = vunpack.c.l.b16 %v1892
        %v1991 = vunpack.c.l.b16 %v1896
        %v1992 = vunpack.c.l.b16 %v1899
        %v1993 = vunpack.c.l.b16 %v1903
        %v1994 = vunpack.c.l.b16 %v1906
        %v1995 = vunpack.c.l.b16 %v1910
        %v1996 = vunpack.c.l.b16 %v1913
        %v1997 = vunpack.c.l.b16 %v1917
        %v1998 = vunpack.c.l.b16 %v1920
        %v1999 = vunpack.c.l.b16 %v1924
        %v2000 = vunpack.c.l.b16 %v1927
        %v2001 = vunpack.c.l.b16 %v1931
        %v2002 = vunpack.c.l.b16 %v1934
        %v2003 = vunpack.c.l.b16 %v1938
        %v2004 = vunpack.c.l.b16 %v1941
        %v2005 = vunpack.c.l.b16 %v1945
        %v2006 = vunpack.c.l.b16 %v1948
        %v2007 = vunpack.c.l.b16 %v1952
        %v2008 = vunpack.c.l.b16 %v1955
        %v2009 = vunpack.c.l.b16 %v1959
        %v2010 = vunpack.c.l.b16 %v1962
        %v2011 = vpack.c.b16 %v1980, %v1979
        %v2012 = vpack.c.b16 %v1982, %v1981
        %v2013 = vpack.c.b16 %v1984, %v1983
        %v2014 = vpack.c.b16 %v1986, %v1985
        %v2015 = vpack.c.b16 %v1988, %v1987
        %v2016 = vpack.c.b16 %v1990, %v1989
        %v2017 = vpack.c.b16 %v1992, %v1991
        %v2018 = vpack.c.b16 %v1994, %v1993
        %v2019 = vpack.c.b16 %v1996, %v1995
        %v2020 = vpack.c.b16 %v1998, %v1997
        %v2021 = vpack.c.b16 %v2000, %v1999
        %v2022 = vpack.c.b16 %v2002, %v2001
        %v2023 = vpack.c.b16 %v2004, %v2003
        %v2024 = vpack.c.b16 %v2006, %v2005
        %v2025 = vpack.c.b16 %v2008, %v2007
        %v2026 = vpack.c.b16 %v2010, %v2009
        %v2028 = vsel %vm425, %v2011, 0
        %v2031 = vsel %vm425, %v2012, 0
        %v2034 = vsel %vm425, %v2013, 0
        %v2037 = vsel %vm425, %v2014, 0
        %v2040 = vsel %vm425, %v2015, 0
        %v2043 = vsel %vm425, %v2016, 0
        %v2046 = vsel %vm425, %v2017, 0
        %v2049 = vsel %vm425, %v2018, 0
        %v2052 = vsel %vm425, %v2019, 0
        %v2055 = vsel %vm425, %v2020, 0
        %v2058 = vsel %vm425, %v2021, 0
        %v2061 = vsel %vm425, %v2022, 0
        %v2064 = vsel %vm425, %v2023, 0
        %v2067 = vsel %vm425, %v2024, 0
        %v2070 = vsel %vm425, %v2025, 0
        %v2073 = vsel %vm425, %v2026, 0
        %v2076 = vsel %vm474, %v1978, 0
        %2078 = vmatpush.bf16.msra.mxu0 0
        %2079 = vmatpush.bf16.msra.mxu0 0
        %2080 = vmatpush.bf16.msra.mxu0 0
        %2081 = vmatpush.bf16.msra.mxu0 0
        %2082 = vmatpush.bf16.msra.mxu0 0
        %2083 = vmatpush.bf16.msra.mxu0 0
        %2084 = vmatpush.bf16.msra.mxu0 0
        %2085 = vmatpush.bf16.msra.mxu0 %v2076
        %2086 = vmatmul.bf16.gmra.mxu0 %v2028
        %v2087 = vpop.f32.mrf.mxu0
        %v2088 = vadd.f32 0.0, %v2087
        %v2089 = vpop.f32.mrf.mxu0
        %v2090 = vadd.f32 0.0, %v2089
        %2091 = vmatmul.bf16.gmra.mxu0 %v2031
        %v2092 = vpop.f32.mrf.mxu0
        %v2093 = vadd.f32 0.0, %v2092
        %v2094 = vpop.f32.mrf.mxu0
        %v2095 = vadd.f32 0.0, %v2094
        %2096 = vmatmul.bf16.gmra.mxu0 %v2034
        %v2097 = vpop.f32.mrf.mxu0
        %v2098 = vadd.f32 0.0, %v2097
        %v2099 = vpop.f32.mrf.mxu0
        %v2100 = vadd.f32 0.0, %v2099
        %2101 = vmatmul.bf16.gmra.mxu0 %v2037
        %v2102 = vpop.f32.mrf.mxu0
        %v2103 = vadd.f32 0.0, %v2102
        %v2104 = vpop.f32.mrf.mxu0
        %v2105 = vadd.f32 0.0, %v2104
        %2106 = vmatmul.bf16.gmra.mxu0 %v2040
        %v2107 = vpop.f32.mrf.mxu0
        %v2108 = vadd.f32 0.0, %v2107
        %v2109 = vpop.f32.mrf.mxu0
        %v2110 = vadd.f32 0.0, %v2109
        %2111 = vmatmul.bf16.gmra.mxu0 %v2043
        %v2112 = vpop.f32.mrf.mxu0
        %v2113 = vadd.f32 0.0, %v2112
        %v2114 = vpop.f32.mrf.mxu0
        %v2115 = vadd.f32 0.0, %v2114
        %2116 = vmatmul.bf16.gmra.mxu0 %v2046
        %v2117 = vpop.f32.mrf.mxu0
        %v2118 = vadd.f32 0.0, %v2117
        %v2119 = vpop.f32.mrf.mxu0
        %v2120 = vadd.f32 0.0, %v2119
        %2121 = vmatmul.bf16.gmra.mxu0 %v2049
        %v2122 = vpop.f32.mrf.mxu0
        %v2123 = vadd.f32 0.0, %v2122
        %v2124 = vpop.f32.mrf.mxu0
        %v2125 = vadd.f32 0.0, %v2124
        %2126 = vmatmul.bf16.gmra.mxu0 %v2052
        %v2127 = vpop.f32.mrf.mxu0
        %v2128 = vadd.f32 0.0, %v2127
        %v2129 = vpop.f32.mrf.mxu0
        %v2130 = vadd.f32 0.0, %v2129
        %2131 = vmatmul.bf16.gmra.mxu0 %v2055
        %v2132 = vpop.f32.mrf.mxu0
        %v2133 = vadd.f32 0.0, %v2132
        %v2134 = vpop.f32.mrf.mxu0
        %v2135 = vadd.f32 0.0, %v2134
        %2136 = vmatmul.bf16.gmra.mxu0 %v2058
        %v2137 = vpop.f32.mrf.mxu0
        %v2138 = vadd.f32 0.0, %v2137
        %v2139 = vpop.f32.mrf.mxu0
        %v2140 = vadd.f32 0.0, %v2139
        %2141 = vmatmul.bf16.gmra.mxu0 %v2061
        %v2142 = vpop.f32.mrf.mxu0
        %v2143 = vadd.f32 0.0, %v2142
        %v2144 = vpop.f32.mrf.mxu0
        %v2145 = vadd.f32 0.0, %v2144
        %2146 = vmatmul.bf16.gmra.mxu0 %v2064
        %v2147 = vpop.f32.mrf.mxu0
        %v2148 = vadd.f32 0.0, %v2147
        %v2149 = vpop.f32.mrf.mxu0
        %v2150 = vadd.f32 0.0, %v2149
        %2151 = vmatmul.bf16.gmra.mxu0 %v2067
        %v2152 = vpop.f32.mrf.mxu0
        %v2153 = vadd.f32 0.0, %v2152
        %v2154 = vpop.f32.mrf.mxu0
        %v2155 = vadd.f32 0.0, %v2154
        %2156 = vmatmul.bf16.gmra.mxu0 %v2070
        %v2157 = vpop.f32.mrf.mxu0
        %v2158 = vadd.f32 0.0, %v2157
        %v2159 = vpop.f32.mrf.mxu0
        %v2160 = vadd.f32 0.0, %v2159
        %2161 = vmatmul.bf16.gmra.mxu0 %v2073
        %v2162 = vpop.f32.mrf.mxu0
        %v2163 = vadd.f32 0.0, %v2162
        %v2164 = vpop.f32.mrf.mxu0
        %v2165 = vadd.f32 0.0, %v2164
        %2166 = vdwg.mxu0
        %v2167 = vadd.f32 %v1744, %v2088
        %v2168 = vadd.f32 %v1745, %v2090
        %v2169 = vadd.f32 %v1746, %v2093
        %v2170 = vadd.f32 %v1747, %v2095
        %v2171 = vadd.f32 %v1748, %v2098
        %v2172 = vadd.f32 %v1749, %v2100
        %v2173 = vadd.f32 %v1750, %v2103
        %v2174 = vadd.f32 %v1751, %v2105
        %v2175 = vadd.f32 %v1752, %v2108
        %v2176 = vadd.f32 %v1753, %v2110
        %v2177 = vadd.f32 %v1754, %v2113
        %v2178 = vadd.f32 %v1755, %v2115
        %v2179 = vadd.f32 %v1756, %v2118
        %v2180 = vadd.f32 %v1757, %v2120
        %v2181 = vadd.f32 %v1758, %v2123
        %v2182 = vadd.f32 %v1759, %v2125
        %v2183 = vadd.f32 %v1760, %v2128
        %v2184 = vadd.f32 %v1761, %v2130
        %v2185 = vadd.f32 %v1762, %v2133
        %v2186 = vadd.f32 %v1763, %v2135
        %v2187 = vadd.f32 %v1764, %v2138
        %v2188 = vadd.f32 %v1765, %v2140
        %v2189 = vadd.f32 %v1766, %v2143
        %v2190 = vadd.f32 %v1767, %v2145
        %v2191 = vadd.f32 %v1768, %v2148
        %v2192 = vadd.f32 %v1769, %v2150
        %v2193 = vadd.f32 %v1770, %v2153
        %v2194 = vadd.f32 %v1771, %v2155
        %v2195 = vadd.f32 %v1772, %v2158
        %v2196 = vadd.f32 %v1773, %v2160
        %v2197 = vadd.f32 %v1774, %v2163
        %v2198 = vadd.f32 %v1775, %v2165
        %s2199 = scalar_lea.vmem %s286, 10
        %v2200 = vld [vmem:[%s2199] sm:$0x3]
        %v2201 = vunpack.c.l.b16 %v1966
        %v2202 = vunpack.c.l.b16 %v1969
        %v2203 = vpack.c.b16 %v2202, %v2201
        %v2205 = vsel %vm425, %v2203, 0
        %v2208 = vsel %vm474, %v2200, 0
        %2210 = vmatpush.bf16.msra.mxu0 0
        %2211 = vmatpush.bf16.msra.mxu0 0
        %2212 = vmatpush.bf16.msra.mxu0 0
        %2213 = vmatpush.bf16.msra.mxu0 0
        %2214 = vmatpush.bf16.msra.mxu0 0
        %2215 = vmatpush.bf16.msra.mxu0 0
        %2216 = vmatpush.bf16.msra.mxu0 0
        %2217 = vmatpush.bf16.msra.mxu0 %v2208
        %2218 = vmatmul.bf16.gmra.mxu0 %v2031
        %v2219 = vpop.f32.mrf.mxu0
        %v2220 = vadd.f32 0.0, %v2219
        %v2221 = vpop.f32.mrf.mxu0
        %v2222 = vadd.f32 0.0, %v2221
        %2223 = vmatmul.bf16.gmra.mxu0 %v2034
        %v2224 = vpop.f32.mrf.mxu0
        %v2225 = vadd.f32 0.0, %v2224
        %v2226 = vpop.f32.mrf.mxu0
        %v2227 = vadd.f32 0.0, %v2226
        %2228 = vmatmul.bf16.gmra.mxu0 %v2037
        %v2229 = vpop.f32.mrf.mxu0
        %v2230 = vadd.f32 0.0, %v2229
        %v2231 = vpop.f32.mrf.mxu0
        %v2232 = vadd.f32 0.0, %v2231
        %2233 = vmatmul.bf16.gmra.mxu0 %v2040
        %v2234 = vpop.f32.mrf.mxu0
        %v2235 = vadd.f32 0.0, %v2234
        %v2236 = vpop.f32.mrf.mxu0
        %v2237 = vadd.f32 0.0, %v2236
        %2238 = vmatmul.bf16.gmra.mxu0 %v2043
        %v2239 = vpop.f32.mrf.mxu0
        %v2240 = vadd.f32 0.0, %v2239
        %v2241 = vpop.f32.mrf.mxu0
        %v2242 = vadd.f32 0.0, %v2241
        %2243 = vmatmul.bf16.gmra.mxu0 %v2046
        %v2244 = vpop.f32.mrf.mxu0
        %v2245 = vadd.f32 0.0, %v2244
        %v2246 = vpop.f32.mrf.mxu0
        %v2247 = vadd.f32 0.0, %v2246
        %2248 = vmatmul.bf16.gmra.mxu0 %v2049
        %v2249 = vpop.f32.mrf.mxu0
        %v2250 = vadd.f32 0.0, %v2249
        %v2251 = vpop.f32.mrf.mxu0
        %v2252 = vadd.f32 0.0, %v2251
        %2253 = vmatmul.bf16.gmra.mxu0 %v2052
        %v2254 = vpop.f32.mrf.mxu0
        %v2255 = vadd.f32 0.0, %v2254
        %v2256 = vpop.f32.mrf.mxu0
        %v2257 = vadd.f32 0.0, %v2256
        %2258 = vmatmul.bf16.gmra.mxu0 %v2055
        %v2259 = vpop.f32.mrf.mxu0
        %v2260 = vadd.f32 0.0, %v2259
        %v2261 = vpop.f32.mrf.mxu0
        %v2262 = vadd.f32 0.0, %v2261
        %2263 = vmatmul.bf16.gmra.mxu0 %v2058
        %v2264 = vpop.f32.mrf.mxu0
        %v2265 = vadd.f32 0.0, %v2264
        %v2266 = vpop.f32.mrf.mxu0
        %v2267 = vadd.f32 0.0, %v2266
        %2268 = vmatmul.bf16.gmra.mxu0 %v2061
        %v2269 = vpop.f32.mrf.mxu0
        %v2270 = vadd.f32 0.0, %v2269
        %v2271 = vpop.f32.mrf.mxu0
        %v2272 = vadd.f32 0.0, %v2271
        %2273 = vmatmul.bf16.gmra.mxu0 %v2064
        %v2274 = vpop.f32.mrf.mxu0
        %v2275 = vadd.f32 0.0, %v2274
        %v2276 = vpop.f32.mrf.mxu0
        %v2277 = vadd.f32 0.0, %v2276
        %2278 = vmatmul.bf16.gmra.mxu0 %v2067
        %v2279 = vpop.f32.mrf.mxu0
        %v2280 = vadd.f32 0.0, %v2279
        %v2281 = vpop.f32.mrf.mxu0
        %v2282 = vadd.f32 0.0, %v2281
        %2283 = vmatmul.bf16.gmra.mxu0 %v2070
        %v2284 = vpop.f32.mrf.mxu0
        %v2285 = vadd.f32 0.0, %v2284
        %v2286 = vpop.f32.mrf.mxu0
        %v2287 = vadd.f32 0.0, %v2286
        %2288 = vmatmul.bf16.gmra.mxu0 %v2073
        %v2289 = vpop.f32.mrf.mxu0
        %v2290 = vadd.f32 0.0, %v2289
        %v2291 = vpop.f32.mrf.mxu0
        %v2292 = vadd.f32 0.0, %v2291
        %2293 = vmatmul.bf16.gmra.mxu0 %v2205
        %v2294 = vpop.f32.mrf.mxu0
        %v2295 = vadd.f32 0.0, %v2294
        %v2296 = vpop.f32.mrf.mxu0
        %v2297 = vadd.f32 0.0, %v2296
        %2298 = vdwg.mxu0
        %v2299 = vadd.f32 %v2167, %v2220
        %v2300 = vadd.f32 %v2168, %v2222
        %v2301 = vadd.f32 %v2169, %v2225
        %v2302 = vadd.f32 %v2170, %v2227
        %v2303 = vadd.f32 %v2171, %v2230
        %v2304 = vadd.f32 %v2172, %v2232
        %v2305 = vadd.f32 %v2173, %v2235
        %v2306 = vadd.f32 %v2174, %v2237
        %v2307 = vadd.f32 %v2175, %v2240
        %v2308 = vadd.f32 %v2176, %v2242
        %v2309 = vadd.f32 %v2177, %v2245
        %v2310 = vadd.f32 %v2178, %v2247
        %v2311 = vadd.f32 %v2179, %v2250
        %v2312 = vadd.f32 %v2180, %v2252
        %v2313 = vadd.f32 %v2181, %v2255
        %v2314 = vadd.f32 %v2182, %v2257
        %v2315 = vadd.f32 %v2183, %v2260
        %v2316 = vadd.f32 %v2184, %v2262
        %v2317 = vadd.f32 %v2185, %v2265
        %v2318 = vadd.f32 %v2186, %v2267
        %v2319 = vadd.f32 %v2187, %v2270
        %v2320 = vadd.f32 %v2188, %v2272
        %v2321 = vadd.f32 %v2189, %v2275
        %v2322 = vadd.f32 %v2190, %v2277
        %v2323 = vadd.f32 %v2191, %v2280
        %v2324 = vadd.f32 %v2192, %v2282
        %v2325 = vadd.f32 %v2193, %v2285
        %v2326 = vadd.f32 %v2194, %v2287
        %v2327 = vadd.f32 %v2195, %v2290
        %v2328 = vadd.f32 %v2196, %v2292
        %v2329 = vadd.f32 %v2197, %v2295
        %v2330 = vadd.f32 %v2198, %v2297
        %s2331 = scalar_lea.vmem %s286, 16
        %v2332 = vld [vmem:[%s2331] sm:$0x3]
        %v2333 = vunpack.c.l.b16 %v1973
        %v2334 = vunpack.c.l.b16 %v1976
        %v2335 = vpack.c.b16 %v2334, %v2333
        %v2337 = vsel %vm425, %v2335, 0
        %v2340 = vsel %vm474, %v2332, 0
        %2342 = vmatpush.bf16.msra.mxu0 0
        %2343 = vmatpush.bf16.msra.mxu0 0
        %2344 = vmatpush.bf16.msra.mxu0 0
        %2345 = vmatpush.bf16.msra.mxu0 0
        %2346 = vmatpush.bf16.msra.mxu0 0
        %2347 = vmatpush.bf16.msra.mxu0 0
        %2348 = vmatpush.bf16.msra.mxu0 0
        %2349 = vmatpush.bf16.msra.mxu0 %v2340
        %2350 = vmatmul.bf16.gmra.mxu0 %v2034
        %v2351 = vpop.f32.mrf.mxu0
        %v2352 = vadd.f32 0.0, %v2351
        %v2353 = vpop.f32.mrf.mxu0
        %v2354 = vadd.f32 0.0, %v2353
        %2355 = vmatmul.bf16.gmra.mxu0 %v2037
        %v2356 = vpop.f32.mrf.mxu0
        %v2357 = vadd.f32 0.0, %v2356
        %v2358 = vpop.f32.mrf.mxu0
        %v2359 = vadd.f32 0.0, %v2358
        %2360 = vmatmul.bf16.gmra.mxu0 %v2040
        %v2361 = vpop.f32.mrf.mxu0
        %v2362 = vadd.f32 0.0, %v2361
        %v2363 = vpop.f32.mrf.mxu0
        %v2364 = vadd.f32 0.0, %v2363
        %2365 = vmatmul.bf16.gmra.mxu0 %v2043
        %v2366 = vpop.f32.mrf.mxu0
        %v2367 = vadd.f32 0.0, %v2366
        %v2368 = vpop.f32.mrf.mxu0
        %v2369 = vadd.f32 0.0, %v2368
        %2370 = vmatmul.bf16.gmra.mxu0 %v2046
        %v2371 = vpop.f32.mrf.mxu0
        %v2372 = vadd.f32 0.0, %v2371
        %v2373 = vpop.f32.mrf.mxu0
        %v2374 = vadd.f32 0.0, %v2373
        %2375 = vmatmul.bf16.gmra.mxu0 %v2049
        %v2376 = vpop.f32.mrf.mxu0
        %v2377 = vadd.f32 0.0, %v2376
        %v2378 = vpop.f32.mrf.mxu0
        %v2379 = vadd.f32 0.0, %v2378
        %2380 = vmatmul.bf16.gmra.mxu0 %v2052
        %v2381 = vpop.f32.mrf.mxu0
        %v2382 = vadd.f32 0.0, %v2381
        %v2383 = vpop.f32.mrf.mxu0
        %v2384 = vadd.f32 0.0, %v2383
        %2385 = vmatmul.bf16.gmra.mxu0 %v2055
        %v2386 = vpop.f32.mrf.mxu0
        %v2387 = vadd.f32 0.0, %v2386
        %v2388 = vpop.f32.mrf.mxu0
        %v2389 = vadd.f32 0.0, %v2388
        %2390 = vmatmul.bf16.gmra.mxu0 %v2058
        %v2391 = vpop.f32.mrf.mxu0
        %v2392 = vadd.f32 0.0, %v2391
        %v2393 = vpop.f32.mrf.mxu0
        %v2394 = vadd.f32 0.0, %v2393
        %2395 = vmatmul.bf16.gmra.mxu0 %v2061
        %v2396 = vpop.f32.mrf.mxu0
        %v2397 = vadd.f32 0.0, %v2396
        %v2398 = vpop.f32.mrf.mxu0
        %v2399 = vadd.f32 0.0, %v2398
        %2400 = vmatmul.bf16.gmra.mxu0 %v2064
        %v2401 = vpop.f32.mrf.mxu0
        %v2402 = vadd.f32 0.0, %v2401
        %v2403 = vpop.f32.mrf.mxu0
        %v2404 = vadd.f32 0.0, %v2403
        %2405 = vmatmul.bf16.gmra.mxu0 %v2067
        %v2406 = vpop.f32.mrf.mxu0
        %v2407 = vadd.f32 0.0, %v2406
        %v2408 = vpop.f32.mrf.mxu0
        %v2409 = vadd.f32 0.0, %v2408
        %2410 = vmatmul.bf16.gmra.mxu0 %v2070
        %v2411 = vpop.f32.mrf.mxu0
        %v2412 = vadd.f32 0.0, %v2411
        %v2413 = vpop.f32.mrf.mxu0
        %v2414 = vadd.f32 0.0, %v2413
        %2415 = vmatmul.bf16.gmra.mxu0 %v2073
        %v2416 = vpop.f32.mrf.mxu0
        %v2417 = vadd.f32 0.0, %v2416
        %v2418 = vpop.f32.mrf.mxu0
        %v2419 = vadd.f32 0.0, %v2418
        %2420 = vmatmul.bf16.gmra.mxu0 %v2205
        %v2421 = vpop.f32.mrf.mxu0
        %v2422 = vadd.f32 0.0, %v2421
        %v2423 = vpop.f32.mrf.mxu0
        %v2424 = vadd.f32 0.0, %v2423
        %2425 = vmatmul.bf16.gmra.mxu0 %v2337
        %v2426 = vpop.f32.mrf.mxu0
        %v2427 = vadd.f32 0.0, %v2426
        %v2428 = vpop.f32.mrf.mxu0
        %v2429 = vadd.f32 0.0, %v2428
        %2430 = vdwg.mxu0
        %v2431 = vadd.f32 %v2299, %v2352
        %v2432 = vadd.f32 %v2300, %v2354
        %v2433 = vadd.f32 %v2301, %v2357
        %v2434 = vadd.f32 %v2302, %v2359
        %v2435 = vadd.f32 %v2303, %v2362
        %v2436 = vadd.f32 %v2304, %v2364
        %v2437 = vadd.f32 %v2305, %v2367
        %v2438 = vadd.f32 %v2306, %v2369
        %v2439 = vadd.f32 %v2307, %v2372
        %v2440 = vadd.f32 %v2308, %v2374
        %v2441 = vadd.f32 %v2309, %v2377
        %v2442 = vadd.f32 %v2310, %v2379
        %v2443 = vadd.f32 %v2311, %v2382
        %v2444 = vadd.f32 %v2312, %v2384
        %v2445 = vadd.f32 %v2313, %v2387
        %v2446 = vadd.f32 %v2314, %v2389
        %v2447 = vadd.f32 %v2315, %v2392
        %v2448 = vadd.f32 %v2316, %v2394
        %v2449 = vadd.f32 %v2317, %v2397
        %v2450 = vadd.f32 %v2318, %v2399
        %v2451 = vadd.f32 %v2319, %v2402
        %v2452 = vadd.f32 %v2320, %v2404
        %v2453 = vadd.f32 %v2321, %v2407
        %v2454 = vadd.f32 %v2322, %v2409
        %v2455 = vadd.f32 %v2323, %v2412
        %v2456 = vadd.f32 %v2324, %v2414
        %v2457 = vadd.f32 %v2325, %v2417
        %v2458 = vadd.f32 %v2326, %v2419
        %v2459 = vadd.f32 %v2327, %v2422
        %v2460 = vadd.f32 %v2328, %v2424
        %v2461 = vadd.f32 %v2329, %v2427
        %v2462 = vadd.f32 %v2330, %v2429
        %v2463 = vld [vmem:[%s295] sm:$0xff]
        %v2464 = vld [vmem:[%s295 + $0x8] sm:$0xff]
        %v2465 = vperm.slane %v2463, 0
        %v2466 = vlaneseq
        %v2467 = vshrl.u32 %v2466, 7
        %2469 = vset.pattern.permute.xlu0 %v2467
        %2470 = vperm.xlu0 %2469, %v2465
        %v2471 = vpop.permute.xlu0 %2470
        %v2472 = vlaneseq
        %v2473 = vshrl.u32 %v2472, 7
        %v2474 = vadd.s32 %v2473, 8
        %2475 = vset.pattern.permute.xlu0 %v2474
        %2476 = vperm.xlu0 %2475, %v2465
        %v2477 = vpop.permute.xlu0 %2476
        %v2478 = vperm.slane %v2463, 1
        %v2479 = vlaneseq
        %v2480 = vshrl.u32 %v2479, 7
        %2482 = vset.pattern.permute.xlu0 %v2480
        %2483 = vperm.xlu0 %2482, %v2478
        %v2484 = vpop.permute.xlu0 %2483
        %v2485 = vlaneseq
        %v2486 = vshrl.u32 %v2485, 7
        %v2487 = vadd.s32 %v2486, 8
        %2488 = vset.pattern.permute.xlu0 %v2487
        %2489 = vperm.xlu0 %2488, %v2478
        %v2490 = vpop.permute.xlu0 %2489
        %v2491 = vperm.slane %v2463, 2
        %v2492 = vlaneseq
        %v2493 = vshrl.u32 %v2492, 7
        %2495 = vset.pattern.permute.xlu0 %v2493
        %2496 = vperm.xlu0 %2495, %v2491
        %v2497 = vpop.permute.xlu0 %2496
        %v2498 = vlaneseq
        %v2499 = vshrl.u32 %v2498, 7
        %v2500 = vadd.s32 %v2499, 8
        %2501 = vset.pattern.permute.xlu0 %v2500
        %2502 = vperm.xlu0 %2501, %v2491
        %v2503 = vpop.permute.xlu0 %2502
        %v2504 = vperm.slane %v2463, 3
        %v2505 = vlaneseq
        %v2506 = vshrl.u32 %v2505, 7
        %2508 = vset.pattern.permute.xlu0 %v2506
        %2509 = vperm.xlu0 %2508, %v2504
        %v2510 = vpop.permute.xlu0 %2509
        %v2511 = vlaneseq
        %v2512 = vshrl.u32 %v2511, 7
        %v2513 = vadd.s32 %v2512, 8
        %2514 = vset.pattern.permute.xlu0 %v2513
        %2515 = vperm.xlu0 %2514, %v2504
        %v2516 = vpop.permute.xlu0 %2515
        %v2517 = vperm.slane %v2463, 4
        %v2518 = vlaneseq
        %v2519 = vshrl.u32 %v2518, 7
        %2521 = vset.pattern.permute.xlu0 %v2519
        %2522 = vperm.xlu0 %2521, %v2517
        %v2523 = vpop.permute.xlu0 %2522
        %v2524 = vlaneseq
        %v2525 = vshrl.u32 %v2524, 7
        %v2526 = vadd.s32 %v2525, 8
        %2527 = vset.pattern.permute.xlu0 %v2526
        %2528 = vperm.xlu0 %2527, %v2517
        %v2529 = vpop.permute.xlu0 %2528
        %v2530 = vperm.slane %v2463, 5
        %v2531 = vlaneseq
        %v2532 = vshrl.u32 %v2531, 7
        %2534 = vset.pattern.permute.xlu0 %v2532
        %2535 = vperm.xlu0 %2534, %v2530
        %v2536 = vpop.permute.xlu0 %2535
        %v2537 = vlaneseq
        %v2538 = vshrl.u32 %v2537, 7
        %v2539 = vadd.s32 %v2538, 8
        %2540 = vset.pattern.permute.xlu0 %v2539
        %2541 = vperm.xlu0 %2540, %v2530
        %v2542 = vpop.permute.xlu0 %2541
        %v2543 = vperm.slane %v2463, 6
        %v2544 = vlaneseq
        %v2545 = vshrl.u32 %v2544, 7
        %2547 = vset.pattern.permute.xlu0 %v2545
        %2548 = vperm.xlu0 %2547, %v2543
        %v2549 = vpop.permute.xlu0 %2548
        %v2550 = vlaneseq
        %v2551 = vshrl.u32 %v2550, 7
        %v2552 = vadd.s32 %v2551, 8
        %2553 = vset.pattern.permute.xlu0 %v2552
        %2554 = vperm.xlu0 %2553, %v2543
        %v2555 = vpop.permute.xlu0 %2554
        %v2556 = vperm.slane %v2463, 7
        %v2557 = vlaneseq
        %v2558 = vshrl.u32 %v2557, 7
        %2560 = vset.pattern.permute.xlu0 %v2558
        %2561 = vperm.xlu0 %2560, %v2556
        %v2562 = vpop.permute.xlu0 %2561
        %v2563 = vlaneseq
        %v2564 = vshrl.u32 %v2563, 7
        %v2565 = vadd.s32 %v2564, 8
        %2566 = vset.pattern.permute.xlu0 %v2565
        %2567 = vperm.xlu0 %2566, %v2556
        %v2568 = vpop.permute.xlu0 %2567
        %v2569 = vperm.slane %v2464, 0
        %v2570 = vlaneseq
        %v2571 = vshrl.u32 %v2570, 7
        %2573 = vset.pattern.permute.xlu0 %v2571
        %2574 = vperm.xlu0 %2573, %v2569
        %v2575 = vpop.permute.xlu0 %2574
        %v2576 = vlaneseq
        %v2577 = vshrl.u32 %v2576, 7
        %v2578 = vadd.s32 %v2577, 8
        %2579 = vset.pattern.permute.xlu0 %v2578
        %2580 = vperm.xlu0 %2579, %v2569
        %v2581 = vpop.permute.xlu0 %2580
        %v2582 = vperm.slane %v2464, 1
        %v2583 = vlaneseq
        %v2584 = vshrl.u32 %v2583, 7
        %2586 = vset.pattern.permute.xlu0 %v2584
        %2587 = vperm.xlu0 %2586, %v2582
        %v2588 = vpop.permute.xlu0 %2587
        %v2589 = vlaneseq
        %v2590 = vshrl.u32 %v2589, 7
        %v2591 = vadd.s32 %v2590, 8
        %2592 = vset.pattern.permute.xlu0 %v2591
        %2593 = vperm.xlu0 %2592, %v2582
        %v2594 = vpop.permute.xlu0 %2593
        %v2595 = vperm.slane %v2464, 2
        %v2596 = vlaneseq
        %v2597 = vshrl.u32 %v2596, 7
        %2599 = vset.pattern.permute.xlu0 %v2597
        %2600 = vperm.xlu0 %2599, %v2595
        %v2601 = vpop.permute.xlu0 %2600
        %v2602 = vlaneseq
        %v2603 = vshrl.u32 %v2602, 7
        %v2604 = vadd.s32 %v2603, 8
        %2605 = vset.pattern.permute.xlu0 %v2604
        %2606 = vperm.xlu0 %2605, %v2595
        %v2607 = vpop.permute.xlu0 %2606
        %v2608 = vperm.slane %v2464, 3
        %v2609 = vlaneseq
        %v2610 = vshrl.u32 %v2609, 7
        %2612 = vset.pattern.permute.xlu0 %v2610
        %2613 = vperm.xlu0 %2612, %v2608
        %v2614 = vpop.permute.xlu0 %2613
        %v2615 = vlaneseq
        %v2616 = vshrl.u32 %v2615, 7
        %v2617 = vadd.s32 %v2616, 8
        %2618 = vset.pattern.permute.xlu0 %v2617
        %2619 = vperm.xlu0 %2618, %v2608
        %v2620 = vpop.permute.xlu0 %2619
        %v2621 = vperm.slane %v2464, 4
        %v2622 = vlaneseq
        %v2623 = vshrl.u32 %v2622, 7
        %2625 = vset.pattern.permute.xlu0 %v2623
        %2626 = vperm.xlu0 %2625, %v2621
        %v2627 = vpop.permute.xlu0 %2626
        %v2628 = vlaneseq
        %v2629 = vshrl.u32 %v2628, 7
        %v2630 = vadd.s32 %v2629, 8
        %2631 = vset.pattern.permute.xlu0 %v2630
        %2632 = vperm.xlu0 %2631, %v2621
        %v2633 = vpop.permute.xlu0 %2632
        %v2634 = vperm.slane %v2464, 5
        %v2635 = vlaneseq
        %v2636 = vshrl.u32 %v2635, 7
        %2638 = vset.pattern.permute.xlu0 %v2636
        %2639 = vperm.xlu0 %2638, %v2634
        %v2640 = vpop.permute.xlu0 %2639
        %v2641 = vlaneseq
        %v2642 = vshrl.u32 %v2641, 7
        %v2643 = vadd.s32 %v2642, 8
        %2644 = vset.pattern.permute.xlu0 %v2643
        %2645 = vperm.xlu0 %2644, %v2634
        %v2646 = vpop.permute.xlu0 %2645
        %v2647 = vperm.slane %v2464, 6
        %v2648 = vlaneseq
        %v2649 = vshrl.u32 %v2648, 7
        %2651 = vset.pattern.permute.xlu0 %v2649
        %2652 = vperm.xlu0 %2651, %v2647
        %v2653 = vpop.permute.xlu0 %2652
        %v2654 = vlaneseq
        %v2655 = vshrl.u32 %v2654, 7
        %v2656 = vadd.s32 %v2655, 8
        %2657 = vset.pattern.permute.xlu0 %v2656
        %2658 = vperm.xlu0 %2657, %v2647
        %v2659 = vpop.permute.xlu0 %2658
        %v2660 = vperm.slane %v2464, 7
        %v2661 = vlaneseq
        %v2662 = vshrl.u32 %v2661, 7
        %2664 = vset.pattern.permute.xlu0 %v2662
        %2665 = vperm.xlu0 %2664, %v2660
        %v2666 = vpop.permute.xlu0 %2665
        %v2667 = vlaneseq
        %v2668 = vshrl.u32 %v2667, 7
        %v2669 = vadd.s32 %v2668, 8
        %2670 = vset.pattern.permute.xlu0 %v2669
        %2671 = vperm.xlu0 %2670, %v2660
        %v2672 = vpop.permute.xlu0 %2671
        %v2673 = vadd.f32 %v2431, %v2471
        %v2674 = vadd.f32 %v2432, %v2477
        %v2675 = vadd.f32 %v2433, %v2484
        %v2676 = vadd.f32 %v2434, %v2490
        %v2677 = vadd.f32 %v2435, %v2497
        %v2678 = vadd.f32 %v2436, %v2503
        %v2679 = vadd.f32 %v2437, %v2510
        %v2680 = vadd.f32 %v2438, %v2516
        %v2681 = vadd.f32 %v2439, %v2523
        %v2682 = vadd.f32 %v2440, %v2529
        %v2683 = vadd.f32 %v2441, %v2536
        %v2684 = vadd.f32 %v2442, %v2542
        %v2685 = vadd.f32 %v2443, %v2549
        %v2686 = vadd.f32 %v2444, %v2555
        %v2687 = vadd.f32 %v2445, %v2562
        %v2688 = vadd.f32 %v2446, %v2568
        %v2689 = vadd.f32 %v2447, %v2575
        %v2690 = vadd.f32 %v2448, %v2581
        %v2691 = vadd.f32 %v2449, %v2588
        %v2692 = vadd.f32 %v2450, %v2594
        %v2693 = vadd.f32 %v2451, %v2601
        %v2694 = vadd.f32 %v2452, %v2607
        %v2695 = vadd.f32 %v2453, %v2614
        %v2696 = vadd.f32 %v2454, %v2620
        %v2697 = vadd.f32 %v2455, %v2627
        %v2698 = vadd.f32 %v2456, %v2633
        %v2699 = vadd.f32 %v2457, %v2640
        %v2700 = vadd.f32 %v2458, %v2646
        %v2701 = vadd.f32 %v2459, %v2653
        %v2702 = vadd.f32 %v2460, %v2659
        %v2703 = vadd.f32 %v2461, %v2666
        %v2704 = vadd.f32 %v2462, %v2672
        %v2705 = vld [vmem:[%s299] sm:$0x1]
        %v2707 = vperm.slane %v2705, 0
        %v2709 = vadd.f32 %v2673, %v2707
        %v2710 = vadd.f32 %v2674, %v2707
        %v2711 = vadd.f32 %v2675, %v2707
        %v2712 = vadd.f32 %v2676, %v2707
        %v2713 = vadd.f32 %v2677, %v2707
        %v2714 = vadd.f32 %v2678, %v2707
        %v2715 = vadd.f32 %v2679, %v2707
        %v2716 = vadd.f32 %v2680, %v2707
        %v2717 = vadd.f32 %v2681, %v2707
        %v2718 = vadd.f32 %v2682, %v2707
        %v2719 = vadd.f32 %v2683, %v2707
        %v2720 = vadd.f32 %v2684, %v2707
        %v2721 = vadd.f32 %v2685, %v2707
        %v2722 = vadd.f32 %v2686, %v2707
        %v2723 = vadd.f32 %v2687, %v2707
        %v2724 = vadd.f32 %v2688, %v2707
        %v2725 = vadd.f32 %v2689, %v2707
        %v2726 = vadd.f32 %v2690, %v2707
        %v2727 = vadd.f32 %v2691, %v2707
        %v2728 = vadd.f32 %v2692, %v2707
        %v2729 = vadd.f32 %v2693, %v2707
        %v2730 = vadd.f32 %v2694, %v2707
        %v2731 = vadd.f32 %v2695, %v2707
        %v2732 = vadd.f32 %v2696, %v2707
        %v2733 = vadd.f32 %v2697, %v2707
        %v2734 = vadd.f32 %v2698, %v2707
        %v2735 = vadd.f32 %v2699, %v2707
        %v2736 = vadd.f32 %v2700, %v2707
        %v2737 = vadd.f32 %v2701, %v2707
        %v2738 = vadd.f32 %v2702, %v2707
        %v2739 = vadd.f32 %v2703, %v2707
        %v2740 = vadd.f32 %v2704, %v2707
        %vm2741 = vcmp.ge.f32.partialorder %v2709, 0.0
        %vm2742 = vcmp.ge.f32.partialorder %v2710, 0.0
        %vm2743 = vcmp.ge.f32.partialorder %v2711, 0.0
        %vm2744 = vcmp.ge.f32.partialorder %v2712, 0.0
        %vm2745 = vcmp.ge.f32.partialorder %v2713, 0.0
        %vm2746 = vcmp.ge.f32.partialorder %v2714, 0.0
        %vm2747 = vcmp.ge.f32.partialorder %v2715, 0.0
        %vm2748 = vcmp.ge.f32.partialorder %v2716, 0.0
        %vm2749 = vcmp.ge.f32.partialorder %v2717, 0.0
        %vm2750 = vcmp.ge.f32.partialorder %v2718, 0.0
        %vm2751 = vcmp.ge.f32.partialorder %v2719, 0.0
        %vm2752 = vcmp.ge.f32.partialorder %v2720, 0.0
        %vm2753 = vcmp.ge.f32.partialorder %v2721, 0.0
        %vm2754 = vcmp.ge.f32.partialorder %v2722, 0.0
        %vm2755 = vcmp.ge.f32.partialorder %v2723, 0.0
        %vm2756 = vcmp.ge.f32.partialorder %v2724, 0.0
        %vm2757 = vcmp.ge.f32.partialorder %v2725, 0.0
        %vm2758 = vcmp.ge.f32.partialorder %v2726, 0.0
        %vm2759 = vcmp.ge.f32.partialorder %v2727, 0.0
        %vm2760 = vcmp.ge.f32.partialorder %v2728, 0.0
        %vm2761 = vcmp.ge.f32.partialorder %v2729, 0.0
        %vm2762 = vcmp.ge.f32.partialorder %v2730, 0.0
        %vm2763 = vcmp.ge.f32.partialorder %v2731, 0.0
        %vm2764 = vcmp.ge.f32.partialorder %v2732, 0.0
        %vm2765 = vcmp.ge.f32.partialorder %v2733, 0.0
        %vm2766 = vcmp.ge.f32.partialorder %v2734, 0.0
        %vm2767 = vcmp.ge.f32.partialorder %v2735, 0.0
        %vm2768 = vcmp.ge.f32.partialorder %v2736, 0.0
        %vm2769 = vcmp.ge.f32.partialorder %v2737, 0.0
        %vm2770 = vcmp.ge.f32.partialorder %v2738, 0.0
        %vm2771 = vcmp.ge.f32.partialorder %v2739, 0.0
        %vm2772 = vcmp.ge.f32.partialorder %v2740, 0.0
        %v2773 = vmul.f32 %v2709, 0.2
        %v2774 = vmul.f32 %v2710, 0.2
        %v2775 = vmul.f32 %v2711, 0.2
        %v2776 = vmul.f32 %v2712, 0.2
        %v2777 = vmul.f32 %v2713, 0.2
        %v2778 = vmul.f32 %v2714, 0.2
        %v2779 = vmul.f32 %v2715, 0.2
        %v2780 = vmul.f32 %v2716, 0.2
        %v2781 = vmul.f32 %v2717, 0.2
        %v2782 = vmul.f32 %v2718, 0.2
        %v2783 = vmul.f32 %v2719, 0.2
        %v2784 = vmul.f32 %v2720, 0.2
        %v2785 = vmul.f32 %v2721, 0.2
        %v2786 = vmul.f32 %v2722, 0.2
        %v2787 = vmul.f32 %v2723, 0.2
        %v2788 = vmul.f32 %v2724, 0.2
        %v2789 = vmul.f32 %v2725, 0.2
        %v2790 = vmul.f32 %v2726, 0.2
        %v2791 = vmul.f32 %v2727, 0.2
        %v2792 = vmul.f32 %v2728, 0.2
        %v2793 = vmul.f32 %v2729, 0.2
        %v2794 = vmul.f32 %v2730, 0.2
        %v2795 = vmul.f32 %v2731, 0.2
        %v2796 = vmul.f32 %v2732, 0.2
        %v2797 = vmul.f32 %v2733, 0.2
        %v2798 = vmul.f32 %v2734, 0.2
        %v2799 = vmul.f32 %v2735, 0.2
        %v2800 = vmul.f32 %v2736, 0.2
        %v2801 = vmul.f32 %v2737, 0.2
        %v2802 = vmul.f32 %v2738, 0.2
        %v2803 = vmul.f32 %v2739, 0.2
        %v2804 = vmul.f32 %v2740, 0.2
        %v2805 = vsel %vm2741, %v2709, %v2773
        %v2806 = vsel %vm2742, %v2710, %v2774
        %v2807 = vsel %vm2743, %v2711, %v2775
        %v2808 = vsel %vm2744, %v2712, %v2776
        %v2809 = vsel %vm2745, %v2713, %v2777
        %v2810 = vsel %vm2746, %v2714, %v2778
        %v2811 = vsel %vm2747, %v2715, %v2779
        %v2812 = vsel %vm2748, %v2716, %v2780
        %v2813 = vsel %vm2749, %v2717, %v2781
        %v2814 = vsel %vm2750, %v2718, %v2782
        %v2815 = vsel %vm2751, %v2719, %v2783
        %v2816 = vsel %vm2752, %v2720, %v2784
        %v2817 = vsel %vm2753, %v2721, %v2785
        %v2818 = vsel %vm2754, %v2722, %v2786
        %v2819 = vsel %vm2755, %v2723, %v2787
        %v2820 = vsel %vm2756, %v2724, %v2788
        %v2821 = vsel %vm2757, %v2725, %v2789
        %v2822 = vsel %vm2758, %v2726, %v2790
        %v2823 = vsel %vm2759, %v2727, %v2791
        %v2824 = vsel %vm2760, %v2728, %v2792
        %v2825 = vsel %vm2761, %v2729, %v2793
        %v2826 = vsel %vm2762, %v2730, %v2794
        %v2827 = vsel %vm2763, %v2731, %v2795
        %v2828 = vsel %vm2764, %v2732, %v2796
        %v2829 = vsel %vm2765, %v2733, %v2797
        %v2830 = vsel %vm2766, %v2734, %v2798
        %v2831 = vsel %vm2767, %v2735, %v2799
        %v2832 = vsel %vm2768, %v2736, %v2800
        %v2833 = vsel %vm2769, %v2737, %v2801
        %v2834 = vsel %vm2770, %v2738, %v2802
        %v2835 = vsel %vm2771, %v2739, %v2803
        %v2836 = vsel %vm2772, %v2740, %v2804
        %v2837 = vmul.f32 %v2805, 1.4142135
        %v2838 = vmul.f32 %v2806, 1.4142135
        %v2839 = vmul.f32 %v2807, 1.4142135
        %v2840 = vmul.f32 %v2808, 1.4142135
        %v2841 = vmul.f32 %v2809, 1.4142135
        %v2842 = vmul.f32 %v2810, 1.4142135
        %v2843 = vmul.f32 %v2811, 1.4142135
        %v2844 = vmul.f32 %v2812, 1.4142135
        %v2845 = vmul.f32 %v2813, 1.4142135
        %v2846 = vmul.f32 %v2814, 1.4142135
        %v2847 = vmul.f32 %v2815, 1.4142135
        %v2848 = vmul.f32 %v2816, 1.4142135
        %v2849 = vmul.f32 %v2817, 1.4142135
        %v2850 = vmul.f32 %v2818, 1.4142135
        %v2851 = vmul.f32 %v2819, 1.4142135
        %v2852 = vmul.f32 %v2820, 1.4142135
        %v2853 = vmul.f32 %v2821, 1.4142135
        %v2854 = vmul.f32 %v2822, 1.4142135
        %v2855 = vmul.f32 %v2823, 1.4142135
        %v2856 = vmul.f32 %v2824, 1.4142135
        %v2857 = vmul.f32 %v2825, 1.4142135
        %v2858 = vmul.f32 %v2826, 1.4142135
        %v2859 = vmul.f32 %v2827, 1.4142135
        %v2860 = vmul.f32 %v2828, 1.4142135
        %v2861 = vmul.f32 %v2829, 1.4142135
        %v2862 = vmul.f32 %v2830, 1.4142135
        %v2863 = vmul.f32 %v2831, 1.4142135
        %v2864 = vmul.f32 %v2832, 1.4142135
        %v2865 = vmul.f32 %v2833, 1.4142135
        %v2866 = vmul.f32 %v2834, 1.4142135
        %v2867 = vmul.f32 %v2835, 1.4142135
        %v2868 = vmul.f32 %v2836, 1.4142135
        %2869 = vst [vmem:[%s273] sm:$0xff] %v2837
        %2870 = vst [vmem:[%s273 + $0x8] sm:$0xff] %v2838
        %2871 = vst [vmem:[%s273 + $0x10] sm:$0xff] %v2839
        %2872 = vst [vmem:[%s273 + $0x18] sm:$0xff] %v2840
        %2873 = vst [vmem:[%s273 + $0x20] sm:$0xff] %v2841
        %2874 = vst [vmem:[%s273 + $0x28] sm:$0xff] %v2842
        %2875 = vst [vmem:[%s273 + $0x30] sm:$0xff] %v2843
        %2876 = vst [vmem:[%s273 + $0x38] sm:$0xff] %v2844
        %2877 = vst [vmem:[%s273 + $0x40] sm:$0xff] %v2845
        %2878 = vst [vmem:[%s273 + $0x48] sm:$0xff] %v2846
        %2879 = vst [vmem:[%s273 + $0x50] sm:$0xff] %v2847
        %2880 = vst [vmem:[%s273 + $0x58] sm:$0xff] %v2848
        %2881 = vst [vmem:[%s273 + $0x60] sm:$0xff] %v2849
        %2882 = vst [vmem:[%s273 + $0x68] sm:$0xff] %v2850
        %2883 = vst [vmem:[%s273 + $0x70] sm:$0xff] %v2851
        %2884 = vst [vmem:[%s273 + $0x78] sm:$0xff] %v2852
        %2885 = vst [vmem:[%s273 + $0x80] sm:$0xff] %v2853
        %2886 = vst [vmem:[%s273 + $0x88] sm:$0xff] %v2854
        %2887 = vst [vmem:[%s273 + $0x90] sm:$0xff] %v2855
        %2888 = vst [vmem:[%s273 + $0x98] sm:$0xff] %v2856
        %2889 = vst [vmem:[%s273 + $0xa0] sm:$0xff] %v2857
        %2890 = vst [vmem:[%s273 + $0xa8] sm:$0xff] %v2858
        %2891 = vst [vmem:[%s273 + $0xb0] sm:$0xff] %v2859
        %2892 = vst [vmem:[%s273 + $0xb8] sm:$0xff] %v2860
        %2893 = vst [vmem:[%s273 + $0xc0] sm:$0xff] %v2861
        %2894 = vst [vmem:[%s273 + $0xc8] sm:$0xff] %v2862
        %2895 = vst [vmem:[%s273 + $0xd0] sm:$0xff] %v2863
        %2896 = vst [vmem:[%s273 + $0xd8] sm:$0xff] %v2864
        %2897 = vst [vmem:[%s273 + $0xe0] sm:$0xff] %v2865
        %2898 = vst [vmem:[%s273 + $0xe8] sm:$0xff] %v2866
        %2899 = vst [vmem:[%s273 + $0xf0] sm:$0xff] %v2867
        %2900 = vst [vmem:[%s273 + $0xf8] sm:$0xff] %v2868
        %s2901 = sand.u32 %s157, 1
        %s2902 = scalar_lea.sflag [#allocation3], %s2901
        %s2903 = sand.u32 %s157, 1
        %s2904 = smul.addr %s2903, 256
        %s2905 = scalar_lea.vmem [#allocation2], %s2904
        // Predicated region
        $region37: #{tpu_custom_call.1} parent=35 // pred_check
          %p2906 = pneg %p167
        $region38: #{tpu_custom_call.1} parent=35 // pred_check_branch
          %2908 = sbr.rel (%p2906) target = $region40
        $region39: #{tpu_custom_call.1} parent=35 // pred_region
          %s2909 = smul.u32 16, %s25
          %2911 = vsyncadd %s2902, 0
          %s2912 = smul.addr %s2909, 2
          %s2913 = sadd.s32 %s24, %s2912
          %s2914 = smul.addr %s23, 32
          %s2915 = sadd.s32 %s2913, %s2914
          %s2916 = smul.addr %s2915, 8
          %s2917 = scalar_lea.hbm %s4, %s2916
          %s2918 = sshll.u32 %s2905, 4
          %s2919 = int_to_ptr.vmem [resolvable:$true] %s2918
          %s2920 = sshll.u32 %s2917, 4
          %s2921 = int_to_ptr.hbm [resolvable:$true] %s2920
          %2926 = dma.vmem_to_hbm [thread:$0]  %s2919, 4096, %s2921, %s2902, 128, 128, 8
        $region40: #{tpu_custom_call.1} parent=35 // pred_fallthru
          _
      $region36: #{tpu_custom_call.1} parent=5 // pred_fallthru
        _
      %p2927 = scmp.le.s32.totalorder 2, %s13
      // Predicated region
      $region41: #{tpu_custom_call.1} parent=5 // pred_check
        %p2928 = pneg %p2927
      $region42: #{tpu_custom_call.1} parent=5 // pred_check_branch
        %2930 = sbr.rel (%p2928) target = $region44
      $region43: #{tpu_custom_call.1} parent=5 // pred_region
        %s2931 = ssub.s32 %s13, 2
        // Predicated region
        $region45: #{tpu_custom_call.1} parent=43 // pred_check
          %p2932 = pneg %p173
        $region46: #{tpu_custom_call.1} parent=43 // pred_check_branch
          %2934 = sbr.rel (%p2932) target = $region48
        $region47: #{tpu_custom_call.1} parent=43 // pred_region
          %s2935 = sand.u32 %s158, 1
          %s2936 = scalar_lea.sflag [#allocation3], %s2935
          %s2937 = sand.u32 %s158, 1
          %s2938 = smul.addr %s2937, 256
          %s2939 = scalar_lea.vmem [#allocation2], %s2938
          %2941 = dma.done %s2936, 4096
        $region48: #{tpu_custom_call.1} parent=43 // pred_fallthru
          _
      $region44: #{tpu_custom_call.1} parent=5 // pred_fallthru
        _
    $region6: #{tpu_custom_call.1} parent=1 // loop_footer
      %s17 = sadd.s32 1, %s13
    $region7: #{tpu_custom_call.1} parent=1 // loop_footer_branch
      %12 = sbr.rel target = $region3
    $region8: #{tpu_custom_call.1} parent=1 // loop_exit
      _
    %2942 = vsyncpa [#allocation3], 1
    %s2943 = scalar_lea.sflag [#allocation3], 1
    %2944 = vsyncpa %s2943, 1

</llo_original>
